<compile_context>
chip_gen: v5e
topology: v5e:2x2
jax: 0.10.0
libtpu: 0.0.40
codegen_flags: <defaults>
</compile_context>

<pallas_src>
import math

import jax
import jax.numpy as jnp
from jax.experimental import pallas as pl
from jax.experimental.pallas import tpu as pltpu

# ---- module hyper-parameters (from task2/gpt.py) -----------------------------------
N_EMBD = 384                       # n_embd
NUM_HEADS = 6
HEAD_SIZE = N_EMBD // NUM_HEADS    # 64
BLOCK_SIZE = 256                   # max context (causal mask); only T <= BLOCK_SIZE used


# ---- fused kernel: one batch element per grid step ----------------------------------
def _mha_fused_kernel(x_ref, wqkv_ref, wp_ref, bp_ref, o_ref):
    # x_ref  : (1, T, C) f32        wqkv_ref : (C, 3*H*D) bf16   (Q | K | V, head-major)
    # wp_ref : (H*D, C)  bf16       bp_ref   : (1, C) f32        o_ref : (1, T, C) f32
    T = x_ref.shape[1]
    H, D = NUM_HEADS, HEAD_SIZE
    HD = H * D

    x = x_ref[0].astype(jnp.bfloat16)                                   # (T, C)

    # Fused QKV projection: one (T,384) @ (384,1152) matmul, f32 MXU accumulation.
    qkv = jnp.dot(x, wqkv_ref[...], preferred_element_type=jnp.float32)  # (T, 3*H*D)
    q_all = qkv[:, 0:HD].astype(jnp.bfloat16)        # (T, H*D)  (1/8 scale folded in Wq)
    k_all = qkv[:, HD:2 * HD].astype(jnp.bfloat16)   # (T, H*D)
    v_all = qkv[:, 2 * HD:3 * HD].astype(jnp.bfloat16)

    # Causal (tril) mask — built once per grid step, reused for every head.
    row = jax.lax.broadcasted_iota(jnp.int32, (T, T), 0)
    col = jax.lax.broadcasted_iota(jnp.int32, (T, T), 1)
    causal = col <= row
    # TODO(synk): exploit causality (query-block tiling that skips j>i key blocks) to
    # save ~half the score/softmax/PV work at T=256; full mask kept for simplicity.

    ctx_heads = []
    for h in range(H):                                # static unroll, H = 6
        q_h = q_all[:, h * D:(h + 1) * D]             # (T, D)
        k_h = k_all[:, h * D:(h + 1) * D]
        v_h = v_all[:, h * D:(h + 1) * D]

        # scores (T,T): contract the head dim (q pre-scaled by 1/sqrt(D) via weights)
        s = jax.lax.dot_general(q_h, k_h, (((1,), (1,)), ((), ())),
                                preferred_element_type=jnp.float32)
        s = jnp.where(causal, s, -jnp.inf)

        # softmax along keys (diagonal always kept -> row max finite, exp(-inf) -> 0)
        s = s - jnp.max(s, axis=-1, keepdims=True)
        p = jnp.exp(s)
        p = p * pl.reciprocal(jnp.sum(p, axis=-1, keepdims=True), approx=True)
        # TODO(synk): training-mode attention dropout (p=0.2) not implemented (eval).

        ctx_heads.append(jnp.dot(p.astype(jnp.bfloat16), v_h,
                                 preferred_element_type=jnp.float32).astype(jnp.bfloat16))

    # Pack per-head contexts lane-wise: (T, H*D) bf16, head-major (matches Wp rows).
    ctx = jnp.concatenate(ctx_heads, axis=-1)

    # Output projection with the head reduction fused into the K=384 MXU contraction.
    out = jnp.dot(ctx, wp_ref[...], preferred_element_type=jnp.float32) + bp_ref[...]
    # TODO(synk): training-mode residual dropout (p=0.2) not implemented (eval).
    o_ref[0] = out.astype(o_ref.dtype)


class MultiHeadAttentionPallas:
    """Pallas re-implementation of the PyTorch MultiHeadAttention forward pass."""

    def __init__(self, num_heads: int, head_size: int, key: jax.Array):
        self.num_heads = num_heads
        self.head_size = head_size
        kq, kk, kv, kp, kb = jax.random.split(key, 5)

        # PyTorch nn.Linear default init: U(-1/sqrt(fan_in), 1/sqrt(fan_in)).
        lim_in = 1.0 / math.sqrt(N_EMBD)
        lim_pr = 1.0 / math.sqrt(num_heads * head_size)
        shape_hd = (num_heads, N_EMBD, head_size)                 # per-head (C, D) weights
        wq = jax.random.uniform(kq, shape_hd, jnp.float32, -lim_in, lim_in)
        wk = jax.random.uniform(kk, shape_hd, jnp.float32, -lim_in, lim_in)
        wv = jax.random.uniform(kv, shape_hd, jnp.float32, -lim_in, lim_in)
        wp = jax.random.uniform(kp, (num_heads * head_size, N_EMBD), jnp.float32,
                                -lim_pr, lim_pr)
        bp = jax.random.uniform(kb, (N_EMBD,), jnp.float32, -lim_pr, lim_pr)

        # Kernel-side weights: fused (C, 3*H*D) QKV with the softmax scale (exact 1/8)
        # folded into the Q block; head-major lane order h*D + d within each third.
        scale = head_size ** -0.5                                  # 0.125 (power of two)
        def pack(w):                                               # (H,C,D) -> (C, H*D)
            return jnp.transpose(w, (1, 0, 2)).reshape(N_EMBD, num_heads * head_size)
        self.wqkv = jnp.concatenate(
            [pack(wq) * scale, pack(wk), pack(wv)], axis=-1).astype(jnp.bfloat16)
        self.wp = wp.astype(jnp.bfloat16)                          # (H*D, C)
        self.bp = bp                                               # (C,) f32

    def __call__(self, x: jax.Array) -> jax.Array:
        B, T, C = x.shape
        H, D = self.num_heads, self.head_size
        HD = H * D
        assert C == N_EMBD and T <= BLOCK_SIZE and T % 8 == 0

        flops = B * (2 * T * C * 3 * HD          # fused QKV projection
                     + 4 * H * T * T * D         # scores + PV
                     + 2 * T * HD * C)           # output projection
        transcendentals = B * H * T * T          # exp
        bytes_accessed = (x.size * 4 + self.wqkv.size * 2 + self.wp.size * 2
                          + self.bp.size * 4 + B * T * C * 4)

        # TODO(synk): on v7x with B == 1 (or odd B) add a parallel query-block grid axis
        # so both TensorCores stay busy; at the tested B=2 both cores get one step each.
        return pl.pallas_call(
            _mha_fused_kernel,
            out_shape=jax.ShapeDtypeStruct((B, T, C), jnp.float32),
            grid_spec=pltpu.PrefetchScalarGridSpec(
                num_scalar_prefetch=0,
                grid=(B,),
                in_specs=[
                    pl.BlockSpec((1, T, C), lambda b: (b, 0, 0)),       # x
                    pl.BlockSpec((C, 3 * HD), lambda b: (0, 0)),        # fused Wqkv
                    pl.BlockSpec((HD, C), lambda b: (0, 0)),            # Wp
                    pl.BlockSpec((1, C), lambda b: (0, 0)),             # bias
                ],
                out_specs=pl.BlockSpec((1, T, C), lambda b: (b, 0, 0)),
            ),
            compiler_params=pltpu.CompilerParams(
                dimension_semantics=("parallel",)),
            cost_estimate=pl.CostEstimate(flops=int(flops),
                                          transcendentals=int(transcendentals),
                                          bytes_accessed=int(bytes_accessed)),
        )(x, self.wqkv, self.wp, self.bp.reshape(1, C))


def _reference_forward(mha: MultiHeadAttentionPallas, x: jax.Array) -> jax.Array:
    """Pure-JAX f32 reference matching the PyTorch forward (eval mode).

    Uses the same (bf16) weights the kernel uses; the 1/sqrt(D) scale is already
    folded into the Q weights, so no explicit score scaling here.
    """
    B, T, C = x.shape
    H, D = mha.num_heads, mha.head_size
    HD = H * D
    wqkv = mha.wqkv.astype(jnp.float32)
    qkv = jnp.einsum("btc,cf->btf", x, wqkv)
    q = qkv[..., 0:HD].reshape(B, T, H, D).transpose(0, 2, 1, 3)
    k = qkv[..., HD:2 * HD].reshape(B, T, H, D).transpose(0, 2, 1, 3)
    v = qkv[..., 2 * HD:].reshape(B, T, H, D).transpose(0, 2, 1, 3)
    wei = jnp.einsum("bhtd,bhsd->bhts", q, k)
    mask = jnp.tril(jnp.ones((T, T), dtype=bool))
    wei = jnp.where(mask, wei, -jnp.inf)
    wei = jax.nn.softmax(wei, axis=-1)
    out = jnp.einsum("bhts,bhsd->bhtd", wei, v)
    out = jnp.transpose(out, (0, 2, 1, 3)).reshape(B, T, HD)
    return out @ mha.wp.astype(jnp.float32) + mha.bp


if __name__ == "__main__":
    key = jax.random.PRNGKey(0)
    k_param, k_x = jax.random.split(key)

    B, T = 2, 8
    x = jax.random.normal(k_x, (B, T, N_EMBD), dtype=jnp.float32)

    mha = MultiHeadAttentionPallas(NUM_HEADS, HEAD_SIZE, k_param)

    y = jax.block_until_ready(mha(x))
    y_ref = _reference_forward(mha, x)

    assert y.shape == (B, T, N_EMBD)
    assert bool(jnp.all(jnp.isfinite(y)))
    assert bool(jnp.allclose(y, y_ref, rtol=2e-2, atol=2e-2))

    print("KERNEL_OK")
</pallas_src>

<mosaic_0001>
module attributes {stable_mosaic.version = 11 : i64} {
  func.func @_mha_fused_kernel(%arg0: i32, %arg1: memref<1x8x384xf32, #tpu.memory_space<vmem>>, %arg2: memref<384x1152xbf16, #tpu.memory_space<vmem>>, %arg3: memref<384x384xbf16, #tpu.memory_space<vmem>>, %arg4: memref<1x384xf32, #tpu.memory_space<vmem>>, %arg5: memref<1x8x384xf32, #tpu.memory_space<vmem>>) attributes {dimension_semantics = [#tpu.dimension_semantics<parallel>], iteration_bounds = array<i64: 2>, scalar_prefetch = 0 : i64, scratch_operands = 0 : i64, tpu.core_type = #tpu.core_type<tc>, window_params = [{transform_indices = @transform_0, window_bounds = array<i64: 1, 8, 384>}, {pipeline_mode = #tpu.pipeline_mode<synchronous>, transform_indices = @transform_1, window_bounds = array<i64: 384, 1152>}, {pipeline_mode = #tpu.pipeline_mode<synchronous>, transform_indices = @transform_2, window_bounds = array<i64: 384, 384>}, {pipeline_mode = #tpu.pipeline_mode<synchronous>, transform_indices = @transform_3, window_bounds = array<i64: 1, 384>}, {transform_indices = @transform_4, window_bounds = array<i64: 1, 8, 384>}]} {
    %c0 = arith.constant 0 : index
    %c0_0 = arith.constant 0 : index
    %c0_1 = arith.constant 0 : index
    %0 = vector.load %arg1[%c0, %c0_0, %c0_1] : memref<1x8x384xf32, #tpu.memory_space<vmem>>, vector<1x8x384xf32>
    %1 = vector.shape_cast %0 : vector<1x8x384xf32> to vector<8x384xf32>
    %2 = arith.truncf %1 : vector<8x384xf32> to vector<8x384xbf16>
    %c0_2 = arith.constant 0 : index
    %c0_3 = arith.constant 0 : index
    %3 = vector.load %arg2[%c0_2, %c0_3] : memref<384x1152xbf16, #tpu.memory_space<vmem>>, vector<384x1152xbf16>
    %cst = arith.constant dense<0.000000e+00> : vector<8x1152xf32>
    %4 = tpu.matmul %2, %3, %cst {dimension_numbers = #tpu.dot_dimension_numbers<[1], [0], [0], [1], [0, 0, 1, 1], [], []>} : vector<8x384xbf16>, vector<384x1152xbf16>, vector<8x1152xf32> -> vector<8x1152xf32>
    %5 = vector.extract_strided_slice %4 {offsets = [0, 0], sizes = [8, 384], strides = [1, 1]} : vector<8x1152xf32> to vector<8x384xf32>
    %6 = arith.truncf %5 : vector<8x384xf32> to vector<8x384xbf16>
    %7 = vector.extract_strided_slice %4 {offsets = [0, 384], sizes = [8, 384], strides = [1, 1]} : vector<8x1152xf32> to vector<8x384xf32>
    %8 = arith.truncf %7 : vector<8x384xf32> to vector<8x384xbf16>
    %9 = vector.extract_strided_slice %4 {offsets = [0, 768], sizes = [8, 384], strides = [1, 1]} : vector<8x1152xf32> to vector<8x384xf32>
    %10 = arith.truncf %9 : vector<8x384xf32> to vector<8x384xbf16>
    %11 = tpu.iota {dimensions = array<i32: 0>} : vector<8x8xi32>
    %12 = tpu.iota {dimensions = array<i32: 1>} : vector<8x8xi32>
    %13 = arith.cmpi sle, %12, %11 : vector<8x8xi32>
    %14 = vector.extract_strided_slice %6 {offsets = [0, 0], sizes = [8, 64], strides = [1, 1]} : vector<8x384xbf16> to vector<8x64xbf16>
    %15 = vector.extract_strided_slice %8 {offsets = [0, 0], sizes = [8, 64], strides = [1, 1]} : vector<8x384xbf16> to vector<8x64xbf16>
    %16 = vector.extract_strided_slice %10 {offsets = [0, 0], sizes = [8, 64], strides = [1, 1]} : vector<8x384xbf16> to vector<8x64xbf16>
    %cst_4 = arith.constant dense<0.000000e+00> : vector<8x8xf32>
    %17 = tpu.matmul %14, %15, %cst_4 {dimension_numbers = #tpu.dot_dimension_numbers<[1], [1], [0], [0], [0, 0, 1, 0], [], []>} : vector<8x64xbf16>, vector<8x64xbf16>, vector<8x8xf32> -> vector<8x8xf32>
    %cst_5 = arith.constant 0xFF800000 : f32
    %18 = vector.broadcast %cst_5 : f32 to vector<8x8xf32>
    %19 = arith.select %13, %17, %18 : vector<8x8xi1>, vector<8x8xf32>
    %cst_6 = arith.constant dense<0xFF800000> : vector<8xf32>
    %20 = vector.multi_reduction <maximumf>, %19, %cst_6 [1] : vector<8x8xf32> to vector<8xf32>
    %21 = vector.shape_cast %20 : vector<8xf32> to vector<8x1xf32>
    %22 = vector.broadcast %21 : vector<8x1xf32> to vector<8x8xf32>
    %23 = arith.subf %19, %22 : vector<8x8xf32>
    %24 = math.exp %23 : vector<8x8xf32>
    %cst_7 = arith.constant dense<0.000000e+00> : vector<8xf32>
    %25 = vector.multi_reduction <add>, %24, %cst_7 [1] : vector<8x8xf32> to vector<8xf32>
    %26 = vector.shape_cast %25 : vector<8xf32> to vector<8x1xf32>
    %27 = tpu.reciprocal %26 {approx = true} : vector<8x1xf32> -> vector<8x1xf32>
    %28 = vector.broadcast %27 : vector<8x1xf32> to vector<8x8xf32>
    %29 = arith.mulf %24, %28 : vector<8x8xf32>
    %30 = arith.truncf %29 : vector<8x8xf32> to vector<8x8xbf16>
    %cst_8 = arith.constant dense<0.000000e+00> : vector<8x64xf32>
    %31 = tpu.matmul %30, %16, %cst_8 {dimension_numbers = #tpu.dot_dimension_numbers<[1], [0], [0], [1], [0, 0, 1, 1], [], []>} : vector<8x8xbf16>, vector<8x64xbf16>, vector<8x64xf32> -> vector<8x64xf32>
    %32 = arith.truncf %31 : vector<8x64xf32> to vector<8x64xbf16>
    %33 = vector.extract_strided_slice %6 {offsets = [0, 64], sizes = [8, 64], strides = [1, 1]} : vector<8x384xbf16> to vector<8x64xbf16>
    %34 = vector.extract_strided_slice %8 {offsets = [0, 64], sizes = [8, 64], strides = [1, 1]} : vector<8x384xbf16> to vector<8x64xbf16>
    %35 = vector.extract_strided_slice %10 {offsets = [0, 64], sizes = [8, 64], strides = [1, 1]} : vector<8x384xbf16> to vector<8x64xbf16>
    %cst_9 = arith.constant dense<0.000000e+00> : vector<8x8xf32>
    %36 = tpu.matmul %33, %34, %cst_9 {dimension_numbers = #tpu.dot_dimension_numbers<[1], [1], [0], [0], [0, 0, 1, 0], [], []>} : vector<8x64xbf16>, vector<8x64xbf16>, vector<8x8xf32> -> vector<8x8xf32>
    %cst_10 = arith.constant 0xFF800000 : f32
    %37 = vector.broadcast %cst_10 : f32 to vector<8x8xf32>
    %38 = arith.select %13, %36, %37 : vector<8x8xi1>, vector<8x8xf32>
    %cst_11 = arith.constant dense<0xFF800000> : vector<8xf32>
    %39 = vector.multi_reduction <maximumf>, %38, %cst_11 [1] : vector<8x8xf32> to vector<8xf32>
    %40 = vector.shape_cast %39 : vector<8xf32> to vector<8x1xf32>
    %41 = vector.broadcast %40 : vector<8x1xf32> to vector<8x8xf32>
    %42 = arith.subf %38, %41 : vector<8x8xf32>
    %43 = math.exp %42 : vector<8x8xf32>
    %cst_12 = arith.constant dense<0.000000e+00> : vector<8xf32>
    %44 = vector.multi_reduction <add>, %43, %cst_12 [1] : vector<8x8xf32> to vector<8xf32>
    %45 = vector.shape_cast %44 : vector<8xf32> to vector<8x1xf32>
    %46 = tpu.reciprocal %45 {approx = true} : vector<8x1xf32> -> vector<8x1xf32>
    %47 = vector.broadcast %46 : vector<8x1xf32> to vector<8x8xf32>
    %48 = arith.mulf %43, %47 : vector<8x8xf32>
    %49 = arith.truncf %48 : vector<8x8xf32> to vector<8x8xbf16>
    %cst_13 = arith.constant dense<0.000000e+00> : vector<8x64xf32>
    %50 = tpu.matmul %49, %35, %cst_13 {dimension_numbers = #tpu.dot_dimension_numbers<[1], [0], [0], [1], [0, 0, 1, 1], [], []>} : vector<8x8xbf16>, vector<8x64xbf16>, vector<8x64xf32> -> vector<8x64xf32>
    %51 = arith.truncf %50 : vector<8x64xf32> to vector<8x64xbf16>
    %52 = vector.extract_strided_slice %6 {offsets = [0, 128], sizes = [8, 64], strides = [1, 1]} : vector<8x384xbf16> to vector<8x64xbf16>
    %53 = vector.extract_strided_slice %8 {offsets = [0, 128], sizes = [8, 64], strides = [1, 1]} : vector<8x384xbf16> to vector<8x64xbf16>
    %54 = vector.extract_strided_slice %10 {offsets = [0, 128], sizes = [8, 64], strides = [1, 1]} : vector<8x384xbf16> to vector<8x64xbf16>
    %cst_14 = arith.constant dense<0.000000e+00> : vector<8x8xf32>
    %55 = tpu.matmul %52, %53, %cst_14 {dimension_numbers = #tpu.dot_dimension_numbers<[1], [1], [0], [0], [0, 0, 1, 0], [], []>} : vector<8x64xbf16>, vector<8x64xbf16>, vector<8x8xf32> -> vector<8x8xf32>
    %cst_15 = arith.constant 0xFF800000 : f32
    %56 = vector.broadcast %cst_15 : f32 to vector<8x8xf32>
    %57 = arith.select %13, %55, %56 : vector<8x8xi1>, vector<8x8xf32>
    %cst_16 = arith.constant dense<0xFF800000> : vector<8xf32>
    %58 = vector.multi_reduction <maximumf>, %57, %cst_16 [1] : vector<8x8xf32> to vector<8xf32>
    %59 = vector.shape_cast %58 : vector<8xf32> to vector<8x1xf32>
    %60 = vector.broadcast %59 : vector<8x1xf32> to vector<8x8xf32>
    %61 = arith.subf %57, %60 : vector<8x8xf32>
    %62 = math.exp %61 : vector<8x8xf32>
    %cst_17 = arith.constant dense<0.000000e+00> : vector<8xf32>
    %63 = vector.multi_reduction <add>, %62, %cst_17 [1] : vector<8x8xf32> to vector<8xf32>
    %64 = vector.shape_cast %63 : vector<8xf32> to vector<8x1xf32>
    %65 = tpu.reciprocal %64 {approx = true} : vector<8x1xf32> -> vector<8x1xf32>
    %66 = vector.broadcast %65 : vector<8x1xf32> to vector<8x8xf32>
    %67 = arith.mulf %62, %66 : vector<8x8xf32>
    %68 = arith.truncf %67 : vector<8x8xf32> to vector<8x8xbf16>
    %cst_18 = arith.constant dense<0.000000e+00> : vector<8x64xf32>
    %69 = tpu.matmul %68, %54, %cst_18 {dimension_numbers = #tpu.dot_dimension_numbers<[1], [0], [0], [1], [0, 0, 1, 1], [], []>} : vector<8x8xbf16>, vector<8x64xbf16>, vector<8x64xf32> -> vector<8x64xf32>
    %70 = arith.truncf %69 : vector<8x64xf32> to vector<8x64xbf16>
    %71 = vector.extract_strided_slice %6 {offsets = [0, 192], sizes = [8, 64], strides = [1, 1]} : vector<8x384xbf16> to vector<8x64xbf16>
    %72 = vector.extract_strided_slice %8 {offsets = [0, 192], sizes = [8, 64], strides = [1, 1]} : vector<8x384xbf16> to vector<8x64xbf16>
    %73 = vector.extract_strided_slice %10 {offsets = [0, 192], sizes = [8, 64], strides = [1, 1]} : vector<8x384xbf16> to vector<8x64xbf16>
    %cst_19 = arith.constant dense<0.000000e+00> : vector<8x8xf32>
    %74 = tpu.matmul %71, %72, %cst_19 {dimension_numbers = #tpu.dot_dimension_numbers<[1], [1], [0], [0], [0, 0, 1, 0], [], []>} : vector<8x64xbf16>, vector<8x64xbf16>, vector<8x8xf32> -> vector<8x8xf32>
    %cst_20 = arith.constant 0xFF800000 : f32
    %75 = vector.broadcast %cst_20 : f32 to vector<8x8xf32>
    %76 = arith.select %13, %74, %75 : vector<8x8xi1>, vector<8x8xf32>
    %cst_21 = arith.constant dense<0xFF800000> : vector<8xf32>
    %77 = vector.multi_reduction <maximumf>, %76, %cst_21 [1] : vector<8x8xf32> to vector<8xf32>
    %78 = vector.shape_cast %77 : vector<8xf32> to vector<8x1xf32>
    %79 = vector.broadcast %78 : vector<8x1xf32> to vector<8x8xf32>
    %80 = arith.subf %76, %79 : vector<8x8xf32>
    %81 = math.exp %80 : vector<8x8xf32>
    %cst_22 = arith.constant dense<0.000000e+00> : vector<8xf32>
    %82 = vector.multi_reduction <add>, %81, %cst_22 [1] : vector<8x8xf32> to vector<8xf32>
    %83 = vector.shape_cast %82 : vector<8xf32> to vector<8x1xf32>
    %84 = tpu.reciprocal %83 {approx = true} : vector<8x1xf32> -> vector<8x1xf32>
    %85 = vector.broadcast %84 : vector<8x1xf32> to vector<8x8xf32>
    %86 = arith.mulf %81, %85 : vector<8x8xf32>
    %87 = arith.truncf %86 : vector<8x8xf32> to vector<8x8xbf16>
    %cst_23 = arith.constant dense<0.000000e+00> : vector<8x64xf32>
    %88 = tpu.matmul %87, %73, %cst_23 {dimension_numbers = #tpu.dot_dimension_numbers<[1], [0], [0], [1], [0, 0, 1, 1], [], []>} : vector<8x8xbf16>, vector<8x64xbf16>, vector<8x64xf32> -> vector<8x64xf32>
    %89 = arith.truncf %88 : vector<8x64xf32> to vector<8x64xbf16>
    %90 = vector.extract_strided_slice %6 {offsets = [0, 256], sizes = [8, 64], strides = [1, 1]} : vector<8x384xbf16> to vector<8x64xbf16>
    %91 = vector.extract_strided_slice %8 {offsets = [0, 256], sizes = [8, 64], strides = [1, 1]} : vector<8x384xbf16> to vector<8x64xbf16>
    %92 = vector.extract_strided_slice %10 {offsets = [0, 256], sizes = [8, 64], strides = [1, 1]} : vector<8x384xbf16> to vector<8x64xbf16>
    %cst_24 = arith.constant dense<0.000000e+00> : vector<8x8xf32>
    %93 = tpu.matmul %90, %91, %cst_24 {dimension_numbers = #tpu.dot_dimension_numbers<[1], [1], [0], [0], [0, 0, 1, 0], [], []>} : vector<8x64xbf16>, vector<8x64xbf16>, vector<8x8xf32> -> vector<8x8xf32>
    %cst_25 = arith.constant 0xFF800000 : f32
    %94 = vector.broadcast %cst_25 : f32 to vector<8x8xf32>
    %95 = arith.select %13, %93, %94 : vector<8x8xi1>, vector<8x8xf32>
    %cst_26 = arith.constant dense<0xFF800000> : vector<8xf32>
    %96 = vector.multi_reduction <maximumf>, %95, %cst_26 [1] : vector<8x8xf32> to vector<8xf32>
    %97 = vector.shape_cast %96 : vector<8xf32> to vector<8x1xf32>
    %98 = vector.broadcast %97 : vector<8x1xf32> to vector<8x8xf32>
    %99 = arith.subf %95, %98 : vector<8x8xf32>
    %100 = math.exp %99 : vector<8x8xf32>
    %cst_27 = arith.constant dense<0.000000e+00> : vector<8xf32>
    %101 = vector.multi_reduction <add>, %100, %cst_27 [1] : vector<8x8xf32> to vector<8xf32>
    %102 = vector.shape_cast %101 : vector<8xf32> to vector<8x1xf32>
    %103 = tpu.reciprocal %102 {approx = true} : vector<8x1xf32> -> vector<8x1xf32>
    %104 = vector.broadcast %103 : vector<8x1xf32> to vector<8x8xf32>
    %105 = arith.mulf %100, %104 : vector<8x8xf32>
    %106 = arith.truncf %105 : vector<8x8xf32> to vector<8x8xbf16>
    %cst_28 = arith.constant dense<0.000000e+00> : vector<8x64xf32>
    %107 = tpu.matmul %106, %92, %cst_28 {dimension_numbers = #tpu.dot_dimension_numbers<[1], [0], [0], [1], [0, 0, 1, 1], [], []>} : vector<8x8xbf16>, vector<8x64xbf16>, vector<8x64xf32> -> vector<8x64xf32>
    %108 = arith.truncf %107 : vector<8x64xf32> to vector<8x64xbf16>
    %109 = vector.extract_strided_slice %6 {offsets = [0, 320], sizes = [8, 64], strides = [1, 1]} : vector<8x384xbf16> to vector<8x64xbf16>
    %110 = vector.extract_strided_slice %8 {offsets = [0, 320], sizes = [8, 64], strides = [1, 1]} : vector<8x384xbf16> to vector<8x64xbf16>
    %111 = vector.extract_strided_slice %10 {offsets = [0, 320], sizes = [8, 64], strides = [1, 1]} : vector<8x384xbf16> to vector<8x64xbf16>
    %cst_29 = arith.constant dense<0.000000e+00> : vector<8x8xf32>
    %112 = tpu.matmul %109, %110, %cst_29 {dimension_numbers = #tpu.dot_dimension_numbers<[1], [1], [0], [0], [0, 0, 1, 0], [], []>} : vector<8x64xbf16>, vector<8x64xbf16>, vector<8x8xf32> -> vector<8x8xf32>
    %cst_30 = arith.constant 0xFF800000 : f32
    %113 = vector.broadcast %cst_30 : f32 to vector<8x8xf32>
    %114 = arith.select %13, %112, %113 : vector<8x8xi1>, vector<8x8xf32>
    %cst_31 = arith.constant dense<0xFF800000> : vector<8xf32>
    %115 = vector.multi_reduction <maximumf>, %114, %cst_31 [1] : vector<8x8xf32> to vector<8xf32>
    %116 = vector.shape_cast %115 : vector<8xf32> to vector<8x1xf32>
    %117 = vector.broadcast %116 : vector<8x1xf32> to vector<8x8xf32>
    %118 = arith.subf %114, %117 : vector<8x8xf32>
    %119 = math.exp %118 : vector<8x8xf32>
    %cst_32 = arith.constant dense<0.000000e+00> : vector<8xf32>
    %120 = vector.multi_reduction <add>, %119, %cst_32 [1] : vector<8x8xf32> to vector<8xf32>
    %121 = vector.shape_cast %120 : vector<8xf32> to vector<8x1xf32>
    %122 = tpu.reciprocal %121 {approx = true} : vector<8x1xf32> -> vector<8x1xf32>
    %123 = vector.broadcast %122 : vector<8x1xf32> to vector<8x8xf32>
    %124 = arith.mulf %119, %123 : vector<8x8xf32>
    %125 = arith.truncf %124 : vector<8x8xf32> to vector<8x8xbf16>
    %cst_33 = arith.constant dense<0.000000e+00> : vector<8x64xf32>
    %126 = tpu.matmul %125, %111, %cst_33 {dimension_numbers = #tpu.dot_dimension_numbers<[1], [0], [0], [1], [0, 0, 1, 1], [], []>} : vector<8x8xbf16>, vector<8x64xbf16>, vector<8x64xf32> -> vector<8x64xf32>
    %127 = arith.truncf %126 : vector<8x64xf32> to vector<8x64xbf16>
    %128 = tpu.concatenate %32, %51, %70, %89, %108, %127 in 1 : vector<8x64xbf16>, vector<8x64xbf16>, vector<8x64xbf16>, vector<8x64xbf16>, vector<8x64xbf16>, vector<8x64xbf16> -> vector<8x384xbf16>
    %c0_34 = arith.constant 0 : index
    %c0_35 = arith.constant 0 : index
    %129 = vector.load %arg3[%c0_34, %c0_35] : memref<384x384xbf16, #tpu.memory_space<vmem>>, vector<384x384xbf16>
    %cst_36 = arith.constant dense<0.000000e+00> : vector<8x384xf32>
    %130 = tpu.matmul %128, %129, %cst_36 {dimension_numbers = #tpu.dot_dimension_numbers<[1], [0], [0], [1], [0, 0, 1, 1], [], []>} : vector<8x384xbf16>, vector<384x384xbf16>, vector<8x384xf32> -> vector<8x384xf32>
    %c0_37 = arith.constant 0 : index
    %c0_38 = arith.constant 0 : index
    %131 = vector.load %arg4[%c0_37, %c0_38] : memref<1x384xf32, #tpu.memory_space<vmem>>, vector<1x384xf32>
    %132 = vector.broadcast %131 : vector<1x384xf32> to vector<8x384xf32>
    %133 = arith.addf %130, %132 : vector<8x384xf32>
    %c0_39 = arith.constant 0 : index
    %c0_40 = arith.constant 0 : index
    %c0_41 = arith.constant 0 : index
    %134 = vector.load %arg5[%c0_39, %c0_40, %c0_41] : memref<1x8x384xf32, #tpu.memory_space<vmem>>, vector<1x8x384xf32>
    %135 = vector.shape_cast %134 : vector<1x8x384xf32> to vector<8x384xf32>
    %136 = vector.shape_cast %133 : vector<8x384xf32> to vector<1x8x384xf32>
    tpu.vector_store %arg5[%c0_39, %c0_40, %c0_41], %136 {strides = array<i32>} : memref<1x8x384xf32, #tpu.memory_space<vmem>>, vector<1x8x384xf32>,
    return
  }
  func.func @transform_0(%arg0: i32) -> (i32, i32, i32) {
    %c0_i32 = arith.constant 0 : i32
    %c0_i32_0 = arith.constant 0 : i32
    %c0_i32_1 = arith.constant 0 : i32
    return %arg0, %c0_i32, %c0_i32_0 : i32, i32, i32
  }
  func.func @transform_1(%arg0: i32) -> (i32, i32) {
    %c0_i32 = arith.constant 0 : i32
    %c0_i32_0 = arith.constant 0 : i32
    %c0_i32_1 = arith.constant 0 : i32
    return %c0_i32, %c0_i32_0 : i32, i32
  }
  func.func @transform_2(%arg0: i32) -> (i32, i32) {
    %c0_i32 = arith.constant 0 : i32
    %c0_i32_0 = arith.constant 0 : i32
    %c0_i32_1 = arith.constant 0 : i32
    return %c0_i32, %c0_i32_0 : i32, i32
  }
  func.func @transform_3(%arg0: i32) -> (i32, i32) {
    %c0_i32 = arith.constant 0 : i32
    %c0_i32_0 = arith.constant 0 : i32
    %c0_i32_1 = arith.constant 0 : i32
    return %c0_i32, %c0_i32_0 : i32, i32
  }
  func.func @transform_4(%arg0: i32) -> (i32, i32, i32) {
    %c0_i32 = arith.constant 0 : i32
    %c0_i32_0 = arith.constant 0 : i32
    %c0_i32_1 = arith.constant 0 : i32
    return %arg0, %c0_i32, %c0_i32_0 : i32, i32, i32
  }
}

</mosaic_0001>

<llo_original>
// kernel: tpu_custom_call.1
$region0: #{tpu_custom_call.1}
  #allocation0 [shape = 'u32[]', space=smem, size = 0x4, offset = 0x4, fixed_abs, tag = 'smem constant byte address 0x4 - core index']
  #allocation1 [shape = 'u32[72,128]{1,0:T(1,128)}', space=vmem, size = 0x9000, scoped, tag = 'internal scratch']
  %s0 = inlined_call_operand.hbm [shape: f32[2,8,384], index: 0, kind: input, shape index: {}]
  %s1 = inlined_call_operand.hbm [shape: bf16[384,1152], index: 1, kind: input, shape index: {}]
  %s2 = inlined_call_operand.hbm [shape: bf16[384,384], index: 2, kind: input, shape index: {}]
  %s3 = inlined_call_operand.hbm [shape: f32[1,384], index: 3, kind: input, shape index: {}]
  %s4 = inlined_call_operand.hbm [shape: f32[2,8,384], index: 4, kind: output, shape index: {}]
  %s5 = sld [smem:[#allocation0]]
  $region65: #{tpu_custom_call.1} parent=0
    _
  %s7 = ssub.s32 1, %s5
  %s8 = scalar_select 0, %s7, %s5
  $region1: #{tpu_custom_call.1} parent=0
    #allocation2 [shape = 'u8[24576]{0}', space=vmem, size = 0x6000, scoped, tag = 'input window, operand 0']
    #allocation3 [shape = 's32[2]{0}', space=sflag, size = 0x8, scoped, tag = 'scoped memory for tpu_custom_call.1']
    #allocation4 [shape = 's32[2]{0}', space=sflag, size = 0x8, scoped, tag = 'scoped memory for tpu_custom_call.1']
    #allocation5 [shape = 'u8[884736]{0}', space=vmem, size = 0xd8000, scoped, tag = 'input window, operand 1, single buffered']
    #allocation6 [shape = 's32[1]{0}', space=sflag, size = 0x4, scoped, tag = 'scoped memory for tpu_custom_call.1']
    #allocation7 [shape = 'u8[294912]{0}', space=vmem, size = 0x48000, scoped, tag = 'input window, operand 2, single buffered']
    #allocation8 [shape = 'u8[1536]{0}', space=vmem, size = 0x800, scoped, tag = 'input window, operand 3, single buffered']
    #allocation9 [shape = 's32[1]{0}', space=sflag, size = 0x4, scoped, tag = 'scoped memory for tpu_custom_call.1']
    #allocation10 [shape = 'u8[24576]{0}', space=vmem, size = 0x6000, scoped, tag = 'output window, operand 0']
    %9 = vsyncpa [#allocation3], 0
    %s10 = scalar_lea.sflag [#allocation3], 1
    %11 = vsyncpa %s10, 0
    %12 = vsyncpa [#allocation6], 0
    %13 = vsyncpa [#allocation9], 0
    %14 = vsyncpa [#allocation4], 0
    %s15 = scalar_lea.sflag [#allocation4], 1
    %16 = vsyncpa %s15, 0
    loop: start=0, step=1, limit=4
    $region2: #{tpu_custom_call.1} parent=1 // loop_pre_header
      _
    $region3: #{tpu_custom_call.1} parent=1 // loop_header
      %s18 = sphi 0, %s22
      %p19 = scmp.ge.s32.totalorder %s18, 4
      %s28 = sphi 0, %s30
      %s31 = sphi 0, %s28
      %s32 = sphi 0, %s31
      %s48 = sphi 0, %s32
      %s52 = sphi 0, %s52
      %s54 = sphi 0, %s52
      %s55 = sphi 0, %s54
      %s69 = sphi 0, %s55
      %s73 = sphi 0, %s73
      %s75 = sphi 0, %s73
      %s76 = sphi 0, %s75
      %s90 = sphi 0, %s76
      %s94 = sphi 0, %s94
      %s96 = sphi 0, %s94
      %s97 = sphi 0, %s96
      %s111 = sphi 0, %s97
      %s117 = sphi 0, %s119
      %s120 = sphi 0, %s117
      %s121 = sphi 0, %s120
      %s137 = sphi 0, %s121
    $region4: #{tpu_custom_call.1} parent=1 // loop_header_branch
      %21 = sbr.rel (%p19) target = $region8
    $region5: #{tpu_custom_call.1} parent=1 // loop_body
      %s23 = ssub.s32 %s18, 1
      %s24 = ssub.s32 %s18, 2
      %s25 = sadd.s32 %s18, 1
      %s26 = ssub.s32 %s18, %s25
      %p27 = scmp.eq.s32.totalorder %s26, 0
      %s29 = sadd.s32 %s28, 1
      %s30 = scalar_select %p27, %s28, %s29
      %p33 = pneg %p27
      %p34 = scmp.eq.s32.totalorder %s18, 1
      %p35 = por %p33, %p34
      %p36 = scmp.ne.s32.totalorder %s28, %s31
      %p37 = scmp.eq.s32.totalorder %s18, 0
      %p38 = por %p36, %p37
      %p39 = scmp.ne.s32.totalorder %s28, %s31
      %p40 = scmp.eq.s32.totalorder %s23, 1
      %p41 = por %p39, %p40
      %p42 = scmp.ne.s32.totalorder %s31, %s32
      %p43 = scmp.eq.s32.totalorder %s23, 0
      %p44 = por %p42, %p43
      %p45 = scmp.ne.s32.totalorder %s31, %s32
      %p46 = scmp.eq.s32.totalorder %s24, 1
      %p47 = por %p45, %p46
      %p49 = scmp.ne.s32.totalorder %s32, %s48
      %p50 = scmp.eq.s32.totalorder %s24, 0
      %p51 = por %p49, %p50
      %s53 = sadd.s32 %s52, 1
      %p56 = scmp.eq.s32.totalorder %s18, 1
      %p57 = scmp.ne.s32.totalorder %s52, %s54
      %p58 = scmp.eq.s32.totalorder %s18, 0
      %p59 = por %p57, %p58
      %p60 = scmp.ne.s32.totalorder %s52, %s54
      %p61 = scmp.eq.s32.totalorder %s23, 1
      %p62 = por %p60, %p61
      %p63 = scmp.ne.s32.totalorder %s54, %s55
      %p64 = scmp.eq.s32.totalorder %s23, 0
      %p65 = por %p63, %p64
      %p66 = scmp.ne.s32.totalorder %s54, %s55
      %p67 = scmp.eq.s32.totalorder %s24, 1
      %p68 = por %p66, %p67
      %p70 = scmp.ne.s32.totalorder %s55, %s69
      %p71 = scmp.eq.s32.totalorder %s24, 0
      %p72 = por %p70, %p71
      %s74 = sadd.s32 %s73, 1
      %p77 = scmp.eq.s32.totalorder %s18, 1
      %p78 = scmp.ne.s32.totalorder %s73, %s75
      %p79 = scmp.eq.s32.totalorder %s18, 0
      %p80 = por %p78, %p79
      %p81 = scmp.ne.s32.totalorder %s73, %s75
      %p82 = scmp.eq.s32.totalorder %s23, 1
      %p83 = por %p81, %p82
      %p84 = scmp.ne.s32.totalorder %s75, %s76
      %p85 = scmp.eq.s32.totalorder %s23, 0
      %p86 = por %p84, %p85
      %p87 = scmp.ne.s32.totalorder %s75, %s76
      %p88 = scmp.eq.s32.totalorder %s24, 1
      %p89 = por %p87, %p88
      %p91 = scmp.ne.s32.totalorder %s76, %s90
      %p92 = scmp.eq.s32.totalorder %s24, 0
      %p93 = por %p91, %p92
      %s95 = sadd.s32 %s94, 1
      %p98 = scmp.eq.s32.totalorder %s18, 1
      %p99 = scmp.ne.s32.totalorder %s94, %s96
      %p100 = scmp.eq.s32.totalorder %s18, 0
      %p101 = por %p99, %p100
      %p102 = scmp.ne.s32.totalorder %s94, %s96
      %p103 = scmp.eq.s32.totalorder %s23, 1
      %p104 = por %p102, %p103
      %p105 = scmp.ne.s32.totalorder %s96, %s97
      %p106 = scmp.eq.s32.totalorder %s23, 0
      %p107 = por %p105, %p106
      %p108 = scmp.ne.s32.totalorder %s96, %s97
      %p109 = scmp.eq.s32.totalorder %s24, 1
      %p110 = por %p108, %p109
      %p112 = scmp.ne.s32.totalorder %s97, %s111
      %p113 = scmp.eq.s32.totalorder %s24, 0
      %p114 = por %p112, %p113
      %s115 = ssub.s32 %s18, %s25
      %p116 = scmp.eq.s32.totalorder %s115, 0
      %s118 = sadd.s32 %s117, 1
      %s119 = scalar_select %p116, %s117, %s118
      %p122 = pneg %p116
      %p123 = scmp.eq.s32.totalorder %s18, 1
      %p124 = por %p122, %p123
      %p125 = scmp.ne.s32.totalorder %s117, %s120
      %p126 = scmp.eq.s32.totalorder %s18, 0
      %p127 = por %p125, %p126
      %p128 = scmp.ne.s32.totalorder %s117, %s120
      %p129 = scmp.eq.s32.totalorder %s23, 1
      %p130 = por %p128, %p129
      %p131 = scmp.ne.s32.totalorder %s120, %s121
      %p132 = scmp.eq.s32.totalorder %s23, 0
      %p133 = por %p131, %p132
      %p134 = scmp.ne.s32.totalorder %s120, %s121
      %p135 = scmp.eq.s32.totalorder %s24, 1
      %p136 = por %p134, %p135
      %p138 = scmp.ne.s32.totalorder %s121, %s137
      %p139 = scmp.eq.s32.totalorder %s24, 0
      %p140 = por %p138, %p139
      %p141 = scmp.le.s32.totalorder 1, %s18
      %p142 = scmp.lt.s32.totalorder %s18, 3
      %p143 = pnand %p141, %p142
      %p144 = pneg %p143
      // Predicated region
      $region9: #{tpu_custom_call.1} parent=5 // pred_check
        _
      $region10: #{tpu_custom_call.1} parent=5 // pred_check_branch
        %146 = sbr.rel (%p143) target = $region12
      $region11: #{tpu_custom_call.1} parent=5 // pred_region
        %s147 = ssub.s32 %s18, 1
        // Predicated region
        $region13: #{tpu_custom_call.1} parent=11 // pred_check
          %p148 = pneg %p65
        $region14: #{tpu_custom_call.1} parent=11 // pred_check_branch
          %150 = sbr.rel (%p148) target = $region16
        $region15: #{tpu_custom_call.1} parent=11 // pred_region
          %152 = vsyncadd [#allocation6], 0
          %s153 = sshll.u32 %s1, 4
          %s154 = int_to_ptr.hbm [resolvable:$true] %s153
          %s155 = sshll.u32 [#allocation5], 4
          %s156 = int_to_ptr.vmem [resolvable:$true] %s155
          %161 = dma.hbm_to_vmem [thread:$0]  %s154, 27648, %s156, [#allocation6], 576, 576, 36
        $region16: #{tpu_custom_call.1} parent=11 // pred_fallthru
          _
        // Predicated region
        $region17: #{tpu_custom_call.1} parent=11 // pred_check
          %p162 = pneg %p86
        $region18: #{tpu_custom_call.1} parent=11 // pred_check_branch
          %164 = sbr.rel (%p162) target = $region20
        $region19: #{tpu_custom_call.1} parent=11 // pred_region
          %166 = vsyncadd [#allocation6], 0
          %s167 = sshll.u32 %s2, 4
          %s168 = int_to_ptr.hbm [resolvable:$true] %s167
          %s169 = sshll.u32 [#allocation7], 4
          %s170 = int_to_ptr.vmem [resolvable:$true] %s169
          %175 = dma.hbm_to_vmem [thread:$0]  %s168, 9216, %s170, [#allocation6], 192, 192, 12
        $region20: #{tpu_custom_call.1} parent=11 // pred_fallthru
          _
        // Predicated region
        $region21: #{tpu_custom_call.1} parent=11 // pred_check
          %p176 = pneg %p107
        $region22: #{tpu_custom_call.1} parent=11 // pred_check_branch
          %178 = sbr.rel (%p176) target = $region24
        $region23: #{tpu_custom_call.1} parent=11 // pred_region
          %180 = vsyncadd [#allocation9], 0
          %s182 = sshll.u32 %s3, 4
          %s183 = int_to_ptr.hbm [resolvable:$true] %s182
          %s184 = sshll.u32 [#allocation8], 4
          %s185 = int_to_ptr.vmem [resolvable:$true] %s184
          %187 = dma.hbm_to_vmem [thread:$0]  %s183, 48, %s185, [#allocation9]
        $region24: #{tpu_custom_call.1} parent=11 // pred_fallthru
          _
      $region12: #{tpu_custom_call.1} parent=5 // pred_fallthru
        _
      %p188 = scmp.lt.s32.totalorder %s18, 2
      // Predicated region
      $region25: #{tpu_custom_call.1} parent=5 // pred_check
        %p189 = pneg %p188
      $region26: #{tpu_custom_call.1} parent=5 // pred_check_branch
        %191 = sbr.rel (%p189) target = $region28
      $region27: #{tpu_custom_call.1} parent=5 // pred_region
        // Predicated region
        $region29: #{tpu_custom_call.1} parent=27 // pred_check
          %p192 = pneg %p38
        $region30: #{tpu_custom_call.1} parent=27 // pred_check_branch
          %194 = sbr.rel (%p192) target = $region32
        $region31: #{tpu_custom_call.1} parent=27 // pred_region
          %s195 = sand.u32 %s28, 1
          %s196 = scalar_lea.sflag [#allocation3], %s195
          %s197 = sand.u32 %s28, 1
          %s198 = smul.addr %s197, 24
          %s199 = scalar_lea.vmem [#allocation2], %s198
          %201 = vsyncadd %s196, 0
          %s202 = smul.addr %s18, 3
          %s203 = smul.addr %s202, 8
          %s204 = scalar_lea.hbm %s0, %s203
          %s206 = sshll.u32 %s204, 4
          %s207 = int_to_ptr.hbm [resolvable:$true] %s206
          %s208 = sshll.u32 %s199, 4
          %s209 = int_to_ptr.vmem [resolvable:$true] %s208
          %211 = dma.hbm_to_vmem [thread:$0]  %s207, 384, %s209, %s196
        $region32: #{tpu_custom_call.1} parent=27 // pred_fallthru
          _
      $region28: #{tpu_custom_call.1} parent=5 // pred_fallthru
        _
      %p212 = scmp.le.s32.totalorder 1, %s18
      %p213 = scmp.lt.s32.totalorder %s18, 3
      %p214 = pnand %p212, %p213
      %p215 = pneg %p214
      // Predicated region
      $region33: #{tpu_custom_call.1} parent=5 // pred_check
        _
      $region34: #{tpu_custom_call.1} parent=5 // pred_check_branch
        %217 = sbr.rel (%p214) target = $region36
      $region35: #{tpu_custom_call.1} parent=5 // pred_region
        %s218 = ssub.s32 %s18, 1
        %s219 = sand.u32 %s31, 1
        %s220 = scalar_lea.sflag [#allocation3], %s219
        %s221 = sand.u32 %s31, 1
        %s222 = smul.addr %s221, 24
        %s223 = scalar_lea.vmem [#allocation2], %s222
        // Predicated region
        $region37: #{tpu_custom_call.1} parent=35 // pred_check
          %p224 = pneg %p44
        $region38: #{tpu_custom_call.1} parent=35 // pred_check_branch
          %226 = sbr.rel (%p224) target = $region40
        $region39: #{tpu_custom_call.1} parent=35 // pred_region
          %228 = dma.done %s220, 384
        $region40: #{tpu_custom_call.1} parent=35 // pred_fallthru
          _
        // Predicated region
        $region41: #{tpu_custom_call.1} parent=35 // pred_check
          %p229 = pneg %p65
        $region42: #{tpu_custom_call.1} parent=35 // pred_check_branch
          %231 = sbr.rel (%p229) target = $region44
        $region43: #{tpu_custom_call.1} parent=35 // pred_region
          %233 = dma.done [#allocation6], 27648
        $region44: #{tpu_custom_call.1} parent=35 // pred_fallthru
          _
        // Predicated region
        $region45: #{tpu_custom_call.1} parent=35 // pred_check
          %p234 = pneg %p86
        $region46: #{tpu_custom_call.1} parent=35 // pred_check_branch
          %236 = sbr.rel (%p234) target = $region48
        $region47: #{tpu_custom_call.1} parent=35 // pred_region
          %238 = dma.done [#allocation6], 9216
        $region48: #{tpu_custom_call.1} parent=35 // pred_fallthru
          _
        // Predicated region
        $region49: #{tpu_custom_call.1} parent=35 // pred_check
          %p239 = pneg %p107
        $region50: #{tpu_custom_call.1} parent=35 // pred_check_branch
          %241 = sbr.rel (%p239) target = $region52
        $region51: #{tpu_custom_call.1} parent=35 // pred_region
          %243 = dma.done [#allocation9], 48
        $region52: #{tpu_custom_call.1} parent=35 // pred_fallthru
          _
        %s244 = sand.u32 %s31, 1
        %s245 = scalar_lea.sflag [#allocation3], %s244
        %s246 = sand.u32 %s31, 1
        %s247 = smul.addr %s246, 24
        %s248 = scalar_lea.vmem [#allocation2], %s247
        %p249 = pneg %p44
        %p250 = pneg %p41
        %p251 = pneg %p65
        %p252 = pneg %p62
        %p253 = pneg %p86
        %p254 = pneg %p83
        %p255 = pneg %p107
        %p256 = pneg %p104
        %p257 = pneg %p133
        %p258 = pneg %p130
        %s259 = sand.u32 %s120, 1
        %s260 = scalar_lea.sflag [#allocation4], %s259
        %s261 = sand.u32 %s120, 1
        %s262 = smul.addr %s261, 24
        %s263 = scalar_lea.vmem [#allocation10], %s262
        %v265 = vld [vmem:[%s223] sm:$0xff]
        %v266 = vld [vmem:[%s223 + $0x8] sm:$0xff]
        %v267 = vld [vmem:[%s223 + $0x10] sm:$0xff]
        %v268 = vpack.c.bf16 %v265, %v265
        %v269 = vpack.c.bf16 %v266, %v266
        %v270 = vpack.c.bf16 %v267, %v267
        %v271 = vld [vmem:[#allocation5] sm:$0xff]
        %v272 = vld [vmem:[#allocation5 + $0x8] sm:$0xff]
        %v273 = vld [vmem:[#allocation5 + $0x10] sm:$0xff]
        %v274 = vld [vmem:[#allocation5 + $0x18] sm:$0xff]
        %v275 = vld [vmem:[#allocation5 + $0x20] sm:$0xf]
        %v276 = vld [vmem:[#allocation5 + $0x24] sm:$0xff]
        %v277 = vld [vmem:[#allocation5 + $0x2c] sm:$0xff]
        %v278 = vld [vmem:[#allocation5 + $0x34] sm:$0xff]
        %v279 = vld [vmem:[#allocation5 + $0x3c] sm:$0xff]
        %v280 = vld [vmem:[#allocation5 + $0x44] sm:$0xf]
        %v281 = vld [vmem:[#allocation5 + $0x48] sm:$0xff]
        %v282 = vld [vmem:[#allocation5 + $0x50] sm:$0xff]
        %v283 = vld [vmem:[#allocation5 + $0x58] sm:$0xff]
        %v284 = vld [vmem:[#allocation5 + $0x60] sm:$0xff]
        %v285 = vld [vmem:[#allocation5 + $0x68] sm:$0xf]
        %v286 = vld [vmem:[#allocation5 + $0x6c] sm:$0xff]
        %v287 = vld [vmem:[#allocation5 + $0x74] sm:$0xff]
        %v288 = vld [vmem:[#allocation5 + $0x7c] sm:$0xff]
        %v289 = vld [vmem:[#allocation5 + $0x84] sm:$0xff]
        %v290 = vld [vmem:[#allocation5 + $0x8c] sm:$0xf]
        %v291 = vld [vmem:[#allocation5 + $0x90] sm:$0xff]
        %v292 = vld [vmem:[#allocation5 + $0x98] sm:$0xff]
        %v293 = vld [vmem:[#allocation5 + $0xa0] sm:$0xff]
        %v294 = vld [vmem:[#allocation5 + $0xa8] sm:$0xff]
        %v295 = vld [vmem:[#allocation5 + $0xb0] sm:$0xf]
        %v296 = vld [vmem:[#allocation5 + $0xb4] sm:$0xff]
        %v297 = vld [vmem:[#allocation5 + $0xbc] sm:$0xff]
        %v298 = vld [vmem:[#allocation5 + $0xc4] sm:$0xff]
        %v299 = vld [vmem:[#allocation5 + $0xcc] sm:$0xff]
        %v300 = vld [vmem:[#allocation5 + $0xd4] sm:$0xf]
        %v301 = vld [vmem:[#allocation5 + $0xd8] sm:$0xff]
        %v302 = vld [vmem:[#allocation5 + $0xe0] sm:$0xff]
        %v303 = vld [vmem:[#allocation5 + $0xe8] sm:$0xff]
        %v304 = vld [vmem:[#allocation5 + $0xf0] sm:$0xff]
        %v305 = vld [vmem:[#allocation5 + $0xf8] sm:$0xf]
        %v306 = vld [vmem:[#allocation5 + $0xfc] sm:$0xff]
        %v307 = vld [vmem:[#allocation5 + $0x104] sm:$0xff]
        %v308 = vld [vmem:[#allocation5 + $0x10c] sm:$0xff]
        %v309 = vld [vmem:[#allocation5 + $0x114] sm:$0xff]
        %v310 = vld [vmem:[#allocation5 + $0x11c] sm:$0xf]
        %v311 = vld [vmem:[#allocation5 + $0x120] sm:$0xff]
        %v312 = vld [vmem:[#allocation5 + $0x128] sm:$0xff]
        %v313 = vld [vmem:[#allocation5 + $0x130] sm:$0xff]
        %v314 = vld [vmem:[#allocation5 + $0x138] sm:$0xff]
        %v315 = vld [vmem:[#allocation5 + $0x140] sm:$0xf]
        %v316 = vld [vmem:[#allocation5 + $0x144] sm:$0xff]
        %v317 = vld [vmem:[#allocation5 + $0x14c] sm:$0xff]
        %v318 = vld [vmem:[#allocation5 + $0x154] sm:$0xff]
        %v319 = vld [vmem:[#allocation5 + $0x15c] sm:$0xff]
        %v320 = vld [vmem:[#allocation5 + $0x164] sm:$0xf]
        %v321 = vld [vmem:[#allocation5 + $0x168] sm:$0xff]
        %v322 = vld [vmem:[#allocation5 + $0x170] sm:$0xff]
        %v323 = vld [vmem:[#allocation5 + $0x178] sm:$0xff]
        %v324 = vld [vmem:[#allocation5 + $0x180] sm:$0xff]
        %v325 = vld [vmem:[#allocation5 + $0x188] sm:$0xf]
        %v326 = vld [vmem:[#allocation5 + $0x18c] sm:$0xff]
        %v327 = vld [vmem:[#allocation5 + $0x194] sm:$0xff]
        %v328 = vld [vmem:[#allocation5 + $0x19c] sm:$0xff]
        %v329 = vld [vmem:[#allocation5 + $0x1a4] sm:$0xff]
        %v330 = vld [vmem:[#allocation5 + $0x1ac] sm:$0xf]
        %v331 = vld [vmem:[#allocation5 + $0x1b0] sm:$0xff]
        %v332 = vld [vmem:[#allocation5 + $0x1b8] sm:$0xff]
        %v333 = vld [vmem:[#allocation5 + $0x1c0] sm:$0xff]
        %v334 = vld [vmem:[#allocation5 + $0x1c8] sm:$0xff]
        %v335 = vld [vmem:[#allocation5 + $0x1d0] sm:$0xf]
        %v336 = vld [vmem:[#allocation5 + $0x1d4] sm:$0xff]
        %v337 = vld [vmem:[#allocation5 + $0x1dc] sm:$0xff]
        %v338 = vld [vmem:[#allocation5 + $0x1e4] sm:$0xff]
        %v339 = vld [vmem:[#allocation5 + $0x1ec] sm:$0xff]
        %v340 = vld [vmem:[#allocation5 + $0x1f4] sm:$0xf]
        %v341 = vld [vmem:[#allocation5 + $0x1f8] sm:$0xff]
        %v342 = vld [vmem:[#allocation5 + $0x200] sm:$0xff]
        %v343 = vld [vmem:[#allocation5 + $0x208] sm:$0xff]
        %v344 = vld [vmem:[#allocation5 + $0x210] sm:$0xff]
        %v345 = vld [vmem:[#allocation5 + $0x218] sm:$0xf]
        %v346 = vld [vmem:[#allocation5 + $0x21c] sm:$0xff]
        %v347 = vld [vmem:[#allocation5 + $0x224] sm:$0xff]
        %v348 = vld [vmem:[#allocation5 + $0x22c] sm:$0xff]
        %v349 = vld [vmem:[#allocation5 + $0x234] sm:$0xff]
        %v350 = vld [vmem:[#allocation5 + $0x23c] sm:$0xf]
        %v351 = vld [vmem:[#allocation5 + $0x240] sm:$0xff]
        %v352 = vld [vmem:[#allocation5 + $0x248] sm:$0xff]
        %v353 = vld [vmem:[#allocation5 + $0x250] sm:$0xff]
        %v354 = vld [vmem:[#allocation5 + $0x258] sm:$0xff]
        %v355 = vld [vmem:[#allocation5 + $0x260] sm:$0xf]
        %v356 = vld [vmem:[#allocation5 + $0x264] sm:$0xff]
        %v357 = vld [vmem:[#allocation5 + $0x26c] sm:$0xff]
        %v358 = vld [vmem:[#allocation5 + $0x274] sm:$0xff]
        %v359 = vld [vmem:[#allocation5 + $0x27c] sm:$0xff]
        %v360 = vld [vmem:[#allocation5 + $0x284] sm:$0xf]
        %v361 = vld [vmem:[#allocation5 + $0x288] sm:$0xff]
        %v362 = vld [vmem:[#allocation5 + $0x290] sm:$0xff]
        %v363 = vld [vmem:[#allocation5 + $0x298] sm:$0xff]
        %v364 = vld [vmem:[#allocation5 + $0x2a0] sm:$0xff]
        %v365 = vld [vmem:[#allocation5 + $0x2a8] sm:$0xf]
        %v366 = vld [vmem:[#allocation5 + $0x2ac] sm:$0xff]
        %v367 = vld [vmem:[#allocation5 + $0x2b4] sm:$0xff]
        %v368 = vld [vmem:[#allocation5 + $0x2bc] sm:$0xff]
        %v369 = vld [vmem:[#allocation5 + $0x2c4] sm:$0xff]
        %v370 = vld [vmem:[#allocation5 + $0x2cc] sm:$0xf]
        %v371 = vld [vmem:[#allocation5 + $0x2d0] sm:$0xff]
        %v372 = vld [vmem:[#allocation5 + $0x2d8] sm:$0xff]
        %v373 = vld [vmem:[#allocation5 + $0x2e0] sm:$0xff]
        %v374 = vld [vmem:[#allocation5 + $0x2e8] sm:$0xff]
        %v375 = vld [vmem:[#allocation5 + $0x2f0] sm:$0xf]
        %v376 = vld [vmem:[#allocation5 + $0x2f4] sm:$0xff]
        %v377 = vld [vmem:[#allocation5 + $0x2fc] sm:$0xff]
        %v378 = vld [vmem:[#allocation5 + $0x304] sm:$0xff]
        %v379 = vld [vmem:[#allocation5 + $0x30c] sm:$0xff]
        %v380 = vld [vmem:[#allocation5 + $0x314] sm:$0xf]
        %v381 = vld [vmem:[#allocation5 + $0x318] sm:$0xff]
        %v382 = vld [vmem:[#allocation5 + $0x320] sm:$0xff]
        %v383 = vld [vmem:[#allocation5 + $0x328] sm:$0xff]
        %v384 = vld [vmem:[#allocation5 + $0x330] sm:$0xff]
        %v385 = vld [vmem:[#allocation5 + $0x338] sm:$0xf]
        %v386 = vld [vmem:[#allocation5 + $0x33c] sm:$0xff]
        %v387 = vld [vmem:[#allocation5 + $0x344] sm:$0xff]
        %v388 = vld [vmem:[#allocation5 + $0x34c] sm:$0xff]
        %v389 = vld [vmem:[#allocation5 + $0x354] sm:$0xff]
        %v390 = vld [vmem:[#allocation5 + $0x35c] sm:$0xf]
        %v391 = vld [vmem:[#allocation5 + $0x360] sm:$0xff]
        %v392 = vld [vmem:[#allocation5 + $0x368] sm:$0xff]
        %v393 = vld [vmem:[#allocation5 + $0x370] sm:$0xff]
        %v394 = vld [vmem:[#allocation5 + $0x378] sm:$0xff]
        %v395 = vld [vmem:[#allocation5 + $0x380] sm:$0xf]
        %v396 = vld [vmem:[#allocation5 + $0x384] sm:$0xff]
        %v397 = vld [vmem:[#allocation5 + $0x38c] sm:$0xff]
        %v398 = vld [vmem:[#allocation5 + $0x394] sm:$0xff]
        %v399 = vld [vmem:[#allocation5 + $0x39c] sm:$0xff]
        %v400 = vld [vmem:[#allocation5 + $0x3a4] sm:$0xf]
        %v401 = vld [vmem:[#allocation5 + $0x3a8] sm:$0xff]
        %v402 = vld [vmem:[#allocation5 + $0x3b0] sm:$0xff]
        %v403 = vld [vmem:[#allocation5 + $0x3b8] sm:$0xff]
        %v404 = vld [vmem:[#allocation5 + $0x3c0] sm:$0xff]
        %v405 = vld [vmem:[#allocation5 + $0x3c8] sm:$0xf]
        %v406 = vld [vmem:[#allocation5 + $0x3cc] sm:$0xff]
        %v407 = vld [vmem:[#allocation5 + $0x3d4] sm:$0xff]
        %v408 = vld [vmem:[#allocation5 + $0x3dc] sm:$0xff]
        %v409 = vld [vmem:[#allocation5 + $0x3e4] sm:$0xff]
        %v410 = vld [vmem:[#allocation5 + $0x3ec] sm:$0xf]
        %v411 = vld [vmem:[#allocation5 + $0x3f0] sm:$0xff]
        %v412 = vld [vmem:[#allocation5 + $0x3f8] sm:$0xff]
        %v413 = vld [vmem:[#allocation5 + $0x400] sm:$0xff]
        %v414 = vld [vmem:[#allocation5 + $0x408] sm:$0xff]
        %v415 = vld [vmem:[#allocation5 + $0x410] sm:$0xf]
        %v416 = vld [vmem:[#allocation5 + $0x414] sm:$0xff]
        %v417 = vld [vmem:[#allocation5 + $0x41c] sm:$0xff]
        %v418 = vld [vmem:[#allocation5 + $0x424] sm:$0xff]
        %v419 = vld [vmem:[#allocation5 + $0x42c] sm:$0xff]
        %v420 = vld [vmem:[#allocation5 + $0x434] sm:$0xf]
        %v421 = vld [vmem:[#allocation5 + $0x438] sm:$0xff]
        %v422 = vld [vmem:[#allocation5 + $0x440] sm:$0xff]
        %v423 = vld [vmem:[#allocation5 + $0x448] sm:$0xff]
        %v424 = vld [vmem:[#allocation5 + $0x450] sm:$0xff]
        %v425 = vld [vmem:[#allocation5 + $0x458] sm:$0xf]
        %v426 = vld [vmem:[#allocation5 + $0x45c] sm:$0xff]
        %v427 = vld [vmem:[#allocation5 + $0x464] sm:$0xff]
        %v428 = vld [vmem:[#allocation5 + $0x46c] sm:$0xff]
        %v429 = vld [vmem:[#allocation5 + $0x474] sm:$0xff]
        %v430 = vld [vmem:[#allocation5 + $0x47c] sm:$0xf]
        %v431 = vld [vmem:[#allocation5 + $0x480] sm:$0xff]
        %v432 = vld [vmem:[#allocation5 + $0x488] sm:$0xff]
        %v433 = vld [vmem:[#allocation5 + $0x490] sm:$0xff]
        %v434 = vld [vmem:[#allocation5 + $0x498] sm:$0xff]
        %v435 = vld [vmem:[#allocation5 + $0x4a0] sm:$0xf]
        %v436 = vld [vmem:[#allocation5 + $0x4a4] sm:$0xff]
        %v437 = vld [vmem:[#allocation5 + $0x4ac] sm:$0xff]
        %v438 = vld [vmem:[#allocation5 + $0x4b4] sm:$0xff]
        %v439 = vld [vmem:[#allocation5 + $0x4bc] sm:$0xff]
        %v440 = vld [vmem:[#allocation5 + $0x4c4] sm:$0xf]
        %v441 = vld [vmem:[#allocation5 + $0x4c8] sm:$0xff]
        %v442 = vld [vmem:[#allocation5 + $0x4d0] sm:$0xff]
        %v443 = vld [vmem:[#allocation5 + $0x4d8] sm:$0xff]
        %v444 = vld [vmem:[#allocation5 + $0x4e0] sm:$0xff]
        %v445 = vld [vmem:[#allocation5 + $0x4e8] sm:$0xf]
        %v446 = vld [vmem:[#allocation5 + $0x4ec] sm:$0xff]
        %v447 = vld [vmem:[#allocation5 + $0x4f4] sm:$0xff]
        %v448 = vld [vmem:[#allocation5 + $0x4fc] sm:$0xff]
        %v449 = vld [vmem:[#allocation5 + $0x504] sm:$0xff]
        %v450 = vld [vmem:[#allocation5 + $0x50c] sm:$0xf]
        %v451 = vld [vmem:[#allocation5 + $0x510] sm:$0xff]
        %v452 = vld [vmem:[#allocation5 + $0x518] sm:$0xff]
        %v453 = vld [vmem:[#allocation5 + $0x520] sm:$0xff]
        %v454 = vld [vmem:[#allocation5 + $0x528] sm:$0xff]
        %v455 = vld [vmem:[#allocation5 + $0x530] sm:$0xf]
        %v456 = vld [vmem:[#allocation5 + $0x534] sm:$0xff]
        %v457 = vld [vmem:[#allocation5 + $0x53c] sm:$0xff]
        %v458 = vld [vmem:[#allocation5 + $0x544] sm:$0xff]
        %v459 = vld [vmem:[#allocation5 + $0x54c] sm:$0xff]
        %v460 = vld [vmem:[#allocation5 + $0x554] sm:$0xf]
        %v461 = vld [vmem:[#allocation5 + $0x558] sm:$0xff]
        %v462 = vld [vmem:[#allocation5 + $0x560] sm:$0xff]
        %v463 = vld [vmem:[#allocation5 + $0x568] sm:$0xff]
        %v464 = vld [vmem:[#allocation5 + $0x570] sm:$0xff]
        %v465 = vld [vmem:[#allocation5 + $0x578] sm:$0xf]
        %v466 = vld [vmem:[#allocation5 + $0x57c] sm:$0xff]
        %v467 = vld [vmem:[#allocation5 + $0x584] sm:$0xff]
        %v468 = vld [vmem:[#allocation5 + $0x58c] sm:$0xff]
        %v469 = vld [vmem:[#allocation5 + $0x594] sm:$0xff]
        %v470 = vld [vmem:[#allocation5 + $0x59c] sm:$0xf]
        %v471 = vld [vmem:[#allocation5 + $0x5a0] sm:$0xff]
        %v472 = vld [vmem:[#allocation5 + $0x5a8] sm:$0xff]
        %v473 = vld [vmem:[#allocation5 + $0x5b0] sm:$0xff]
        %v474 = vld [vmem:[#allocation5 + $0x5b8] sm:$0xff]
        %v475 = vld [vmem:[#allocation5 + $0x5c0] sm:$0xf]
        %v476 = vld [vmem:[#allocation5 + $0x5c4] sm:$0xff]
        %v477 = vld [vmem:[#allocation5 + $0x5cc] sm:$0xff]
        %v478 = vld [vmem:[#allocation5 + $0x5d4] sm:$0xff]
        %v479 = vld [vmem:[#allocation5 + $0x5dc] sm:$0xff]
        %v480 = vld [vmem:[#allocation5 + $0x5e4] sm:$0xf]
        %v481 = vld [vmem:[#allocation5 + $0x5e8] sm:$0xff]
        %v482 = vld [vmem:[#allocation5 + $0x5f0] sm:$0xff]
        %v483 = vld [vmem:[#allocation5 + $0x5f8] sm:$0xff]
        %v484 = vld [vmem:[#allocation5 + $0x600] sm:$0xff]
        %v485 = vld [vmem:[#allocation5 + $0x608] sm:$0xf]
        %v486 = vld [vmem:[#allocation5 + $0x60c] sm:$0xff]
        %v487 = vld [vmem:[#allocation5 + $0x614] sm:$0xff]
        %v488 = vld [vmem:[#allocation5 + $0x61c] sm:$0xff]
        %v489 = vld [vmem:[#allocation5 + $0x624] sm:$0xff]
        %v490 = vld [vmem:[#allocation5 + $0x62c] sm:$0xf]
        %v491 = vld [vmem:[#allocation5 + $0x630] sm:$0xff]
        %v492 = vld [vmem:[#allocation5 + $0x638] sm:$0xff]
        %v493 = vld [vmem:[#allocation5 + $0x640] sm:$0xff]
        %v494 = vld [vmem:[#allocation5 + $0x648] sm:$0xff]
        %v495 = vld [vmem:[#allocation5 + $0x650] sm:$0xf]
        %v496 = vld [vmem:[#allocation5 + $0x654] sm:$0xff]
        %v497 = vld [vmem:[#allocation5 + $0x65c] sm:$0xff]
        %v498 = vld [vmem:[#allocation5 + $0x664] sm:$0xff]
        %v499 = vld [vmem:[#allocation5 + $0x66c] sm:$0xff]
        %v500 = vld [vmem:[#allocation5 + $0x674] sm:$0xf]
        %v501 = vld [vmem:[#allocation5 + $0x678] sm:$0xff]
        %v502 = vld [vmem:[#allocation5 + $0x680] sm:$0xff]
        %v503 = vld [vmem:[#allocation5 + $0x688] sm:$0xff]
        %v504 = vld [vmem:[#allocation5 + $0x690] sm:$0xff]
        %v505 = vld [vmem:[#allocation5 + $0x698] sm:$0xf]
        %v506 = vld [vmem:[#allocation5 + $0x69c] sm:$0xff]
        %v507 = vld [vmem:[#allocation5 + $0x6a4] sm:$0xff]
        %v508 = vld [vmem:[#allocation5 + $0x6ac] sm:$0xff]
        %v509 = vld [vmem:[#allocation5 + $0x6b4] sm:$0xff]
        %v510 = vld [vmem:[#allocation5 + $0x6bc] sm:$0xf]
        %v751 = vunpack.c.l.b16 %v271
        %v752 = vunpack.c.h.b16 %v271
        %v753 = vunpack.c.l.b16 %v272
        %v754 = vunpack.c.h.b16 %v272
        %v755 = vunpack.c.l.b16 %v273
        %v756 = vunpack.c.h.b16 %v273
        %v757 = vunpack.c.l.b16 %v274
        %v758 = vunpack.c.h.b16 %v274
        %v759 = vunpack.c.l.b16 %v275
        %v760 = vunpack.c.l.b16 %v276
        %v761 = vunpack.c.h.b16 %v276
        %v762 = vunpack.c.l.b16 %v277
        %v763 = vunpack.c.h.b16 %v277
        %v764 = vunpack.c.l.b16 %v278
        %v765 = vunpack.c.h.b16 %v278
        %v766 = vunpack.c.l.b16 %v279
        %v767 = vunpack.c.h.b16 %v279
        %v768 = vunpack.c.l.b16 %v280
        %v769 = vunpack.c.l.b16 %v281
        %v770 = vunpack.c.h.b16 %v281
        %v771 = vunpack.c.l.b16 %v282
        %v772 = vunpack.c.h.b16 %v282
        %v773 = vunpack.c.l.b16 %v283
        %v774 = vunpack.c.h.b16 %v283
        %v775 = vunpack.c.l.b16 %v284
        %v776 = vunpack.c.h.b16 %v284
        %v777 = vunpack.c.l.b16 %v285
        %v778 = vunpack.c.l.b16 %v286
        %v779 = vunpack.c.h.b16 %v286
        %v780 = vunpack.c.l.b16 %v287
        %v781 = vunpack.c.h.b16 %v287
        %v782 = vunpack.c.l.b16 %v288
        %v783 = vunpack.c.h.b16 %v288
        %v784 = vunpack.c.l.b16 %v289
        %v785 = vunpack.c.h.b16 %v289
        %v786 = vunpack.c.l.b16 %v290
        %v787 = vunpack.c.l.b16 %v291
        %v788 = vunpack.c.h.b16 %v291
        %v789 = vunpack.c.l.b16 %v292
        %v790 = vunpack.c.h.b16 %v292
        %v791 = vunpack.c.l.b16 %v293
        %v792 = vunpack.c.h.b16 %v293
        %v793 = vunpack.c.l.b16 %v294
        %v794 = vunpack.c.h.b16 %v294
        %v795 = vunpack.c.l.b16 %v295
        %v796 = vunpack.c.l.b16 %v296
        %v797 = vunpack.c.h.b16 %v296
        %v798 = vunpack.c.l.b16 %v297
        %v799 = vunpack.c.h.b16 %v297
        %v800 = vunpack.c.l.b16 %v298
        %v801 = vunpack.c.h.b16 %v298
        %v802 = vunpack.c.l.b16 %v299
        %v803 = vunpack.c.h.b16 %v299
        %v804 = vunpack.c.l.b16 %v300
        %v805 = vunpack.c.l.b16 %v301
        %v806 = vunpack.c.h.b16 %v301
        %v807 = vunpack.c.l.b16 %v302
        %v808 = vunpack.c.h.b16 %v302
        %v809 = vunpack.c.l.b16 %v303
        %v810 = vunpack.c.h.b16 %v303
        %v811 = vunpack.c.l.b16 %v304
        %v812 = vunpack.c.h.b16 %v304
        %v813 = vunpack.c.l.b16 %v305
        %v814 = vunpack.c.l.b16 %v306
        %v815 = vunpack.c.h.b16 %v306
        %v816 = vunpack.c.l.b16 %v307
        %v817 = vunpack.c.h.b16 %v307
        %v818 = vunpack.c.l.b16 %v308
        %v819 = vunpack.c.h.b16 %v308
        %v820 = vunpack.c.l.b16 %v309
        %v821 = vunpack.c.h.b16 %v309
        %v822 = vunpack.c.l.b16 %v310
        %v823 = vunpack.c.l.b16 %v311
        %v824 = vunpack.c.h.b16 %v311
        %v825 = vunpack.c.l.b16 %v312
        %v826 = vunpack.c.h.b16 %v312
        %v827 = vunpack.c.l.b16 %v313
        %v828 = vunpack.c.h.b16 %v313
        %v829 = vunpack.c.l.b16 %v314
        %v830 = vunpack.c.h.b16 %v314
        %v831 = vunpack.c.l.b16 %v315
        %v832 = vunpack.c.l.b16 %v316
        %v833 = vunpack.c.h.b16 %v316
        %v834 = vunpack.c.l.b16 %v317
        %v835 = vunpack.c.h.b16 %v317
        %v836 = vunpack.c.l.b16 %v318
        %v837 = vunpack.c.h.b16 %v318
        %v838 = vunpack.c.l.b16 %v319
        %v839 = vunpack.c.h.b16 %v319
        %v840 = vunpack.c.l.b16 %v320
        %v841 = vunpack.c.l.b16 %v321
        %v842 = vunpack.c.h.b16 %v321
        %v843 = vunpack.c.l.b16 %v322
        %v844 = vunpack.c.h.b16 %v322
        %v845 = vunpack.c.l.b16 %v323
        %v846 = vunpack.c.h.b16 %v323
        %v847 = vunpack.c.l.b16 %v324
        %v848 = vunpack.c.h.b16 %v324
        %v849 = vunpack.c.l.b16 %v325
        %v850 = vunpack.c.l.b16 %v326
        %v851 = vunpack.c.h.b16 %v326
        %v852 = vunpack.c.l.b16 %v327
        %v853 = vunpack.c.h.b16 %v327
        %v854 = vunpack.c.l.b16 %v328
        %v855 = vunpack.c.h.b16 %v328
        %v856 = vunpack.c.l.b16 %v329
        %v857 = vunpack.c.h.b16 %v329
        %v858 = vunpack.c.l.b16 %v330
        %v859 = vunpack.c.l.b16 %v331
        %v860 = vunpack.c.h.b16 %v331
        %v861 = vunpack.c.l.b16 %v332
        %v862 = vunpack.c.h.b16 %v332
        %v863 = vunpack.c.l.b16 %v333
        %v864 = vunpack.c.h.b16 %v333
        %v865 = vunpack.c.l.b16 %v334
        %v866 = vunpack.c.h.b16 %v334
        %v867 = vunpack.c.l.b16 %v335
        %v868 = vunpack.c.l.b16 %v336
        %v869 = vunpack.c.h.b16 %v336
        %v870 = vunpack.c.l.b16 %v337
        %v871 = vunpack.c.h.b16 %v337
        %v872 = vunpack.c.l.b16 %v338
        %v873 = vunpack.c.h.b16 %v338
        %v874 = vunpack.c.l.b16 %v339
        %v875 = vunpack.c.h.b16 %v339
        %v876 = vunpack.c.l.b16 %v340
        %v877 = vunpack.c.l.b16 %v341
        %v878 = vunpack.c.h.b16 %v341
        %v879 = vunpack.c.l.b16 %v342
        %v880 = vunpack.c.h.b16 %v342
        %v881 = vunpack.c.l.b16 %v343
        %v882 = vunpack.c.h.b16 %v343
        %v883 = vunpack.c.l.b16 %v344
        %v884 = vunpack.c.h.b16 %v344
        %v885 = vunpack.c.l.b16 %v345
        %v886 = vunpack.c.l.b16 %v346
        %v887 = vunpack.c.h.b16 %v346
        %v888 = vunpack.c.l.b16 %v347
        %v889 = vunpack.c.h.b16 %v347
        %v890 = vunpack.c.l.b16 %v348
        %v891 = vunpack.c.h.b16 %v348
        %v892 = vunpack.c.l.b16 %v349
        %v893 = vunpack.c.h.b16 %v349
        %v894 = vunpack.c.l.b16 %v350
        %v895 = vunpack.c.l.b16 %v351
        %v896 = vunpack.c.h.b16 %v351
        %v897 = vunpack.c.l.b16 %v352
        %v898 = vunpack.c.h.b16 %v352
        %v899 = vunpack.c.l.b16 %v353
        %v900 = vunpack.c.h.b16 %v353
        %v901 = vunpack.c.l.b16 %v354
        %v902 = vunpack.c.h.b16 %v354
        %v903 = vunpack.c.l.b16 %v355
        %v904 = vunpack.c.l.b16 %v356
        %v905 = vunpack.c.h.b16 %v356
        %v906 = vunpack.c.l.b16 %v357
        %v907 = vunpack.c.h.b16 %v357
        %v908 = vunpack.c.l.b16 %v358
        %v909 = vunpack.c.h.b16 %v358
        %v910 = vunpack.c.l.b16 %v359
        %v911 = vunpack.c.h.b16 %v359
        %v912 = vunpack.c.l.b16 %v360
        %v913 = vunpack.c.l.b16 %v361
        %v914 = vunpack.c.h.b16 %v361
        %v915 = vunpack.c.l.b16 %v362
        %v916 = vunpack.c.h.b16 %v362
        %v917 = vunpack.c.l.b16 %v363
        %v918 = vunpack.c.h.b16 %v363
        %v919 = vunpack.c.l.b16 %v364
        %v920 = vunpack.c.h.b16 %v364
        %v921 = vunpack.c.l.b16 %v365
        %v922 = vunpack.c.l.b16 %v366
        %v923 = vunpack.c.h.b16 %v366
        %v924 = vunpack.c.l.b16 %v367
        %v925 = vunpack.c.h.b16 %v367
        %v926 = vunpack.c.l.b16 %v368
        %v927 = vunpack.c.h.b16 %v368
        %v928 = vunpack.c.l.b16 %v369
        %v929 = vunpack.c.h.b16 %v369
        %v930 = vunpack.c.l.b16 %v370
        %v931 = vunpack.c.l.b16 %v371
        %v932 = vunpack.c.h.b16 %v371
        %v933 = vunpack.c.l.b16 %v372
        %v934 = vunpack.c.h.b16 %v372
        %v935 = vunpack.c.l.b16 %v373
        %v936 = vunpack.c.h.b16 %v373
        %v937 = vunpack.c.l.b16 %v374
        %v938 = vunpack.c.h.b16 %v374
        %v939 = vunpack.c.l.b16 %v375
        %v940 = vunpack.c.l.b16 %v376
        %v941 = vunpack.c.h.b16 %v376
        %v942 = vunpack.c.l.b16 %v377
        %v943 = vunpack.c.h.b16 %v377
        %v944 = vunpack.c.l.b16 %v378
        %v945 = vunpack.c.h.b16 %v378
        %v946 = vunpack.c.l.b16 %v379
        %v947 = vunpack.c.h.b16 %v379
        %v948 = vunpack.c.l.b16 %v380
        %v949 = vunpack.c.l.b16 %v381
        %v950 = vunpack.c.h.b16 %v381
        %v951 = vunpack.c.l.b16 %v382
        %v952 = vunpack.c.h.b16 %v382
        %v953 = vunpack.c.l.b16 %v383
        %v954 = vunpack.c.h.b16 %v383
        %v955 = vunpack.c.l.b16 %v384
        %v956 = vunpack.c.h.b16 %v384
        %v957 = vunpack.c.l.b16 %v385
        %v958 = vunpack.c.l.b16 %v386
        %v959 = vunpack.c.h.b16 %v386
        %v960 = vunpack.c.l.b16 %v387
        %v961 = vunpack.c.h.b16 %v387
        %v962 = vunpack.c.l.b16 %v388
        %v963 = vunpack.c.h.b16 %v388
        %v964 = vunpack.c.l.b16 %v389
        %v965 = vunpack.c.h.b16 %v389
        %v966 = vunpack.c.l.b16 %v390
        %v967 = vunpack.c.l.b16 %v391
        %v968 = vunpack.c.h.b16 %v391
        %v969 = vunpack.c.l.b16 %v392
        %v970 = vunpack.c.h.b16 %v392
        %v971 = vunpack.c.l.b16 %v393
        %v972 = vunpack.c.h.b16 %v393
        %v973 = vunpack.c.l.b16 %v394
        %v974 = vunpack.c.h.b16 %v394
        %v975 = vunpack.c.l.b16 %v395
        %v976 = vunpack.c.l.b16 %v396
        %v977 = vunpack.c.h.b16 %v396
        %v978 = vunpack.c.l.b16 %v397
        %v979 = vunpack.c.h.b16 %v397
        %v980 = vunpack.c.l.b16 %v398
        %v981 = vunpack.c.h.b16 %v398
        %v982 = vunpack.c.l.b16 %v399
        %v983 = vunpack.c.h.b16 %v399
        %v984 = vunpack.c.l.b16 %v400
        %v985 = vunpack.c.l.b16 %v401
        %v986 = vunpack.c.h.b16 %v401
        %v987 = vunpack.c.l.b16 %v402
        %v988 = vunpack.c.h.b16 %v402
        %v989 = vunpack.c.l.b16 %v403
        %v990 = vunpack.c.h.b16 %v403
        %v991 = vunpack.c.l.b16 %v404
        %v992 = vunpack.c.h.b16 %v404
        %v993 = vunpack.c.l.b16 %v405
        %v994 = vunpack.c.l.b16 %v406
        %v995 = vunpack.c.h.b16 %v406
        %v996 = vunpack.c.l.b16 %v407
        %v997 = vunpack.c.h.b16 %v407
        %v998 = vunpack.c.l.b16 %v408
        %v999 = vunpack.c.h.b16 %v408
        %v1000 = vunpack.c.l.b16 %v409
        %v1001 = vunpack.c.h.b16 %v409
        %v1002 = vunpack.c.l.b16 %v410
        %v1003 = vunpack.c.l.b16 %v411
        %v1004 = vunpack.c.h.b16 %v411
        %v1005 = vunpack.c.l.b16 %v412
        %v1006 = vunpack.c.h.b16 %v412
        %v1007 = vunpack.c.l.b16 %v413
        %v1008 = vunpack.c.h.b16 %v413
        %v1009 = vunpack.c.l.b16 %v414
        %v1010 = vunpack.c.h.b16 %v414
        %v1011 = vunpack.c.l.b16 %v415
        %v1012 = vunpack.c.l.b16 %v416
        %v1013 = vunpack.c.h.b16 %v416
        %v1014 = vunpack.c.l.b16 %v417
        %v1015 = vunpack.c.h.b16 %v417
        %v1016 = vunpack.c.l.b16 %v418
        %v1017 = vunpack.c.h.b16 %v418
        %v1018 = vunpack.c.l.b16 %v419
        %v1019 = vunpack.c.h.b16 %v419
        %v1020 = vunpack.c.l.b16 %v420
        %v1021 = vunpack.c.l.b16 %v421
        %v1022 = vunpack.c.h.b16 %v421
        %v1023 = vunpack.c.l.b16 %v422
        %v1024 = vunpack.c.h.b16 %v422
        %v1025 = vunpack.c.l.b16 %v423
        %v1026 = vunpack.c.h.b16 %v423
        %v1027 = vunpack.c.l.b16 %v424
        %v1028 = vunpack.c.h.b16 %v424
        %v1029 = vunpack.c.l.b16 %v425
        %v1030 = vunpack.c.l.b16 %v426
        %v1031 = vunpack.c.h.b16 %v426
        %v1032 = vunpack.c.l.b16 %v427
        %v1033 = vunpack.c.h.b16 %v427
        %v1034 = vunpack.c.l.b16 %v428
        %v1035 = vunpack.c.h.b16 %v428
        %v1036 = vunpack.c.l.b16 %v429
        %v1037 = vunpack.c.h.b16 %v429
        %v1038 = vunpack.c.l.b16 %v430
        %v1039 = vunpack.c.l.b16 %v431
        %v1040 = vunpack.c.h.b16 %v431
        %v1041 = vunpack.c.l.b16 %v432
        %v1042 = vunpack.c.h.b16 %v432
        %v1043 = vunpack.c.l.b16 %v433
        %v1044 = vunpack.c.h.b16 %v433
        %v1045 = vunpack.c.l.b16 %v434
        %v1046 = vunpack.c.h.b16 %v434
        %v1047 = vunpack.c.l.b16 %v435
        %v1048 = vunpack.c.l.b16 %v436
        %v1049 = vunpack.c.h.b16 %v436
        %v1050 = vunpack.c.l.b16 %v437
        %v1051 = vunpack.c.h.b16 %v437
        %v1052 = vunpack.c.l.b16 %v438
        %v1053 = vunpack.c.h.b16 %v438
        %v1054 = vunpack.c.l.b16 %v439
        %v1055 = vunpack.c.h.b16 %v439
        %v1056 = vunpack.c.l.b16 %v440
        %v1057 = vunpack.c.l.b16 %v441
        %v1058 = vunpack.c.h.b16 %v441
        %v1059 = vunpack.c.l.b16 %v442
        %v1060 = vunpack.c.h.b16 %v442
        %v1061 = vunpack.c.l.b16 %v443
        %v1062 = vunpack.c.h.b16 %v443
        %v1063 = vunpack.c.l.b16 %v444
        %v1064 = vunpack.c.h.b16 %v444
        %v1065 = vunpack.c.l.b16 %v445
        %v1066 = vunpack.c.l.b16 %v446
        %v1067 = vunpack.c.h.b16 %v446
        %v1068 = vunpack.c.l.b16 %v447
        %v1069 = vunpack.c.h.b16 %v447
        %v1070 = vunpack.c.l.b16 %v448
        %v1071 = vunpack.c.h.b16 %v448
        %v1072 = vunpack.c.l.b16 %v449
        %v1073 = vunpack.c.h.b16 %v449
        %v1074 = vunpack.c.l.b16 %v450
        %v1075 = vunpack.c.l.b16 %v451
        %v1076 = vunpack.c.h.b16 %v451
        %v1077 = vunpack.c.l.b16 %v452
        %v1078 = vunpack.c.h.b16 %v452
        %v1079 = vunpack.c.l.b16 %v453
        %v1080 = vunpack.c.h.b16 %v453
        %v1081 = vunpack.c.l.b16 %v454
        %v1082 = vunpack.c.h.b16 %v454
        %v1083 = vunpack.c.l.b16 %v455
        %v1084 = vunpack.c.l.b16 %v456
        %v1085 = vunpack.c.h.b16 %v456
        %v1086 = vunpack.c.l.b16 %v457
        %v1087 = vunpack.c.h.b16 %v457
        %v1088 = vunpack.c.l.b16 %v458
        %v1089 = vunpack.c.h.b16 %v458
        %v1090 = vunpack.c.l.b16 %v459
        %v1091 = vunpack.c.h.b16 %v459
        %v1092 = vunpack.c.l.b16 %v460
        %v1093 = vunpack.c.l.b16 %v461
        %v1094 = vunpack.c.h.b16 %v461
        %v1095 = vunpack.c.l.b16 %v462
        %v1096 = vunpack.c.h.b16 %v462
        %v1097 = vunpack.c.l.b16 %v463
        %v1098 = vunpack.c.h.b16 %v463
        %v1099 = vunpack.c.l.b16 %v464
        %v1100 = vunpack.c.h.b16 %v464
        %v1101 = vunpack.c.l.b16 %v465
        %v1102 = vunpack.c.l.b16 %v466
        %v1103 = vunpack.c.h.b16 %v466
        %v1104 = vunpack.c.l.b16 %v467
        %v1105 = vunpack.c.h.b16 %v467
        %v1106 = vunpack.c.l.b16 %v468
        %v1107 = vunpack.c.h.b16 %v468
        %v1108 = vunpack.c.l.b16 %v469
        %v1109 = vunpack.c.h.b16 %v469
        %v1110 = vunpack.c.l.b16 %v470
        %v1111 = vunpack.c.l.b16 %v471
        %v1112 = vunpack.c.h.b16 %v471
        %v1113 = vunpack.c.l.b16 %v472
        %v1114 = vunpack.c.h.b16 %v472
        %v1115 = vunpack.c.l.b16 %v473
        %v1116 = vunpack.c.h.b16 %v473
        %v1117 = vunpack.c.l.b16 %v474
        %v1118 = vunpack.c.h.b16 %v474
        %v1119 = vunpack.c.l.b16 %v475
        %v1120 = vunpack.c.l.b16 %v476
        %v1121 = vunpack.c.h.b16 %v476
        %v1122 = vunpack.c.l.b16 %v477
        %v1123 = vunpack.c.h.b16 %v477
        %v1124 = vunpack.c.l.b16 %v478
        %v1125 = vunpack.c.h.b16 %v478
        %v1126 = vunpack.c.l.b16 %v479
        %v1127 = vunpack.c.h.b16 %v479
        %v1128 = vunpack.c.l.b16 %v480
        %v1129 = vunpack.c.l.b16 %v481
        %v1130 = vunpack.c.h.b16 %v481
        %v1131 = vunpack.c.l.b16 %v482
        %v1132 = vunpack.c.h.b16 %v482
        %v1133 = vunpack.c.l.b16 %v483
        %v1134 = vunpack.c.h.b16 %v483
        %v1135 = vunpack.c.l.b16 %v484
        %v1136 = vunpack.c.h.b16 %v484
        %v1137 = vunpack.c.l.b16 %v485
        %v1138 = vunpack.c.l.b16 %v486
        %v1139 = vunpack.c.h.b16 %v486
        %v1140 = vunpack.c.l.b16 %v487
        %v1141 = vunpack.c.h.b16 %v487
        %v1142 = vunpack.c.l.b16 %v488
        %v1143 = vunpack.c.h.b16 %v488
        %v1144 = vunpack.c.l.b16 %v489
        %v1145 = vunpack.c.h.b16 %v489
        %v1146 = vunpack.c.l.b16 %v490
        %v1147 = vunpack.c.l.b16 %v491
        %v1148 = vunpack.c.h.b16 %v491
        %v1149 = vunpack.c.l.b16 %v492
        %v1150 = vunpack.c.h.b16 %v492
        %v1151 = vunpack.c.l.b16 %v493
        %v1152 = vunpack.c.h.b16 %v493
        %v1153 = vunpack.c.l.b16 %v494
        %v1154 = vunpack.c.h.b16 %v494
        %v1155 = vunpack.c.l.b16 %v495
        %v1156 = vunpack.c.l.b16 %v496
        %v1157 = vunpack.c.h.b16 %v496
        %v1158 = vunpack.c.l.b16 %v497
        %v1159 = vunpack.c.h.b16 %v497
        %v1160 = vunpack.c.l.b16 %v498
        %v1161 = vunpack.c.h.b16 %v498
        %v1162 = vunpack.c.l.b16 %v499
        %v1163 = vunpack.c.h.b16 %v499
        %v1164 = vunpack.c.l.b16 %v500
        %v1165 = vunpack.c.l.b16 %v501
        %v1166 = vunpack.c.h.b16 %v501
        %v1167 = vunpack.c.l.b16 %v502
        %v1168 = vunpack.c.h.b16 %v502
        %v1169 = vunpack.c.l.b16 %v503
        %v1170 = vunpack.c.h.b16 %v503
        %v1171 = vunpack.c.l.b16 %v504
        %v1172 = vunpack.c.h.b16 %v504
        %v1173 = vunpack.c.l.b16 %v505
        %v1174 = vunpack.c.l.b16 %v506
        %v1175 = vunpack.c.h.b16 %v506
        %v1176 = vunpack.c.l.b16 %v507
        %v1177 = vunpack.c.h.b16 %v507
        %v1178 = vunpack.c.l.b16 %v508
        %v1179 = vunpack.c.h.b16 %v508
        %v1180 = vunpack.c.l.b16 %v509
        %v1181 = vunpack.c.h.b16 %v509
        %v1182 = vunpack.c.l.b16 %v510
        %v1183 = vpack.c.b16 %v760, %v751
        %v1184 = vpack.c.b16 %v761, %v752
        %v1185 = vpack.c.b16 %v762, %v753
        %v1186 = vpack.c.b16 %v763, %v754
        %v1187 = vpack.c.b16 %v764, %v755
        %v1188 = vpack.c.b16 %v765, %v756
        %v1189 = vpack.c.b16 %v766, %v757
        %v1190 = vpack.c.b16 %v767, %v758
        %v1191 = vpack.c.b16 %v768, %v759
        %v1192 = vpack.c.b16 %v778, %v769
        %v1193 = vpack.c.b16 %v779, %v770
        %v1194 = vpack.c.b16 %v780, %v771
        %v1195 = vpack.c.b16 %v781, %v772
        %v1196 = vpack.c.b16 %v782, %v773
        %v1197 = vpack.c.b16 %v783, %v774
        %v1198 = vpack.c.b16 %v784, %v775
        %v1199 = vpack.c.b16 %v785, %v776
        %v1200 = vpack.c.b16 %v786, %v777
        %v1201 = vpack.c.b16 %v796, %v787
        %v1202 = vpack.c.b16 %v797, %v788
        %v1203 = vpack.c.b16 %v798, %v789
        %v1204 = vpack.c.b16 %v799, %v790
        %v1205 = vpack.c.b16 %v800, %v791
        %v1206 = vpack.c.b16 %v801, %v792
        %v1207 = vpack.c.b16 %v802, %v793
        %v1208 = vpack.c.b16 %v803, %v794
        %v1209 = vpack.c.b16 %v804, %v795
        %v1210 = vpack.c.b16 %v814, %v805
        %v1211 = vpack.c.b16 %v815, %v806
        %v1212 = vpack.c.b16 %v816, %v807
        %v1213 = vpack.c.b16 %v817, %v808
        %v1214 = vpack.c.b16 %v818, %v809
        %v1215 = vpack.c.b16 %v819, %v810
        %v1216 = vpack.c.b16 %v820, %v811
        %v1217 = vpack.c.b16 %v821, %v812
        %v1218 = vpack.c.b16 %v822, %v813
        %v1219 = vpack.c.b16 %v832, %v823
        %v1220 = vpack.c.b16 %v833, %v824
        %v1221 = vpack.c.b16 %v834, %v825
        %v1222 = vpack.c.b16 %v835, %v826
        %v1223 = vpack.c.b16 %v836, %v827
        %v1224 = vpack.c.b16 %v837, %v828
        %v1225 = vpack.c.b16 %v838, %v829
        %v1226 = vpack.c.b16 %v839, %v830
        %v1227 = vpack.c.b16 %v840, %v831
        %v1228 = vpack.c.b16 %v850, %v841
        %v1229 = vpack.c.b16 %v851, %v842
        %v1230 = vpack.c.b16 %v852, %v843
        %v1231 = vpack.c.b16 %v853, %v844
        %v1232 = vpack.c.b16 %v854, %v845
        %v1233 = vpack.c.b16 %v855, %v846
        %v1234 = vpack.c.b16 %v856, %v847
        %v1235 = vpack.c.b16 %v857, %v848
        %v1236 = vpack.c.b16 %v858, %v849
        %v1237 = vpack.c.b16 %v868, %v859
        %v1238 = vpack.c.b16 %v869, %v860
        %v1239 = vpack.c.b16 %v870, %v861
        %v1240 = vpack.c.b16 %v871, %v862
        %v1241 = vpack.c.b16 %v872, %v863
        %v1242 = vpack.c.b16 %v873, %v864
        %v1243 = vpack.c.b16 %v874, %v865
        %v1244 = vpack.c.b16 %v875, %v866
        %v1245 = vpack.c.b16 %v876, %v867
        %v1246 = vpack.c.b16 %v886, %v877
        %v1247 = vpack.c.b16 %v887, %v878
        %v1248 = vpack.c.b16 %v888, %v879
        %v1249 = vpack.c.b16 %v889, %v880
        %v1250 = vpack.c.b16 %v890, %v881
        %v1251 = vpack.c.b16 %v891, %v882
        %v1252 = vpack.c.b16 %v892, %v883
        %v1253 = vpack.c.b16 %v893, %v884
        %v1254 = vpack.c.b16 %v894, %v885
        %v1255 = vpack.c.b16 %v904, %v895
        %v1256 = vpack.c.b16 %v905, %v896
        %v1257 = vpack.c.b16 %v906, %v897
        %v1258 = vpack.c.b16 %v907, %v898
        %v1259 = vpack.c.b16 %v908, %v899
        %v1260 = vpack.c.b16 %v909, %v900
        %v1261 = vpack.c.b16 %v910, %v901
        %v1262 = vpack.c.b16 %v911, %v902
        %v1263 = vpack.c.b16 %v912, %v903
        %v1264 = vpack.c.b16 %v922, %v913
        %v1265 = vpack.c.b16 %v923, %v914
        %v1266 = vpack.c.b16 %v924, %v915
        %v1267 = vpack.c.b16 %v925, %v916
        %v1268 = vpack.c.b16 %v926, %v917
        %v1269 = vpack.c.b16 %v927, %v918
        %v1270 = vpack.c.b16 %v928, %v919
        %v1271 = vpack.c.b16 %v929, %v920
        %v1272 = vpack.c.b16 %v930, %v921
        %v1273 = vpack.c.b16 %v940, %v931
        %v1274 = vpack.c.b16 %v941, %v932
        %v1275 = vpack.c.b16 %v942, %v933
        %v1276 = vpack.c.b16 %v943, %v934
        %v1277 = vpack.c.b16 %v944, %v935
        %v1278 = vpack.c.b16 %v945, %v936
        %v1279 = vpack.c.b16 %v946, %v937
        %v1280 = vpack.c.b16 %v947, %v938
        %v1281 = vpack.c.b16 %v948, %v939
        %v1282 = vpack.c.b16 %v958, %v949
        %v1283 = vpack.c.b16 %v959, %v950
        %v1284 = vpack.c.b16 %v960, %v951
        %v1285 = vpack.c.b16 %v961, %v952
        %v1286 = vpack.c.b16 %v962, %v953
        %v1287 = vpack.c.b16 %v963, %v954
        %v1288 = vpack.c.b16 %v964, %v955
        %v1289 = vpack.c.b16 %v965, %v956
        %v1290 = vpack.c.b16 %v966, %v957
        %v1291 = vpack.c.b16 %v976, %v967
        %v1292 = vpack.c.b16 %v977, %v968
        %v1293 = vpack.c.b16 %v978, %v969
        %v1294 = vpack.c.b16 %v979, %v970
        %v1295 = vpack.c.b16 %v980, %v971
        %v1296 = vpack.c.b16 %v981, %v972
        %v1297 = vpack.c.b16 %v982, %v973
        %v1298 = vpack.c.b16 %v983, %v974
        %v1299 = vpack.c.b16 %v984, %v975
        %v1300 = vpack.c.b16 %v994, %v985
        %v1301 = vpack.c.b16 %v995, %v986
        %v1302 = vpack.c.b16 %v996, %v987
        %v1303 = vpack.c.b16 %v997, %v988
        %v1304 = vpack.c.b16 %v998, %v989
        %v1305 = vpack.c.b16 %v999, %v990
        %v1306 = vpack.c.b16 %v1000, %v991
        %v1307 = vpack.c.b16 %v1001, %v992
        %v1308 = vpack.c.b16 %v1002, %v993
        %v1309 = vpack.c.b16 %v1012, %v1003
        %v1310 = vpack.c.b16 %v1013, %v1004
        %v1311 = vpack.c.b16 %v1014, %v1005
        %v1312 = vpack.c.b16 %v1015, %v1006
        %v1313 = vpack.c.b16 %v1016, %v1007
        %v1314 = vpack.c.b16 %v1017, %v1008
        %v1315 = vpack.c.b16 %v1018, %v1009
        %v1316 = vpack.c.b16 %v1019, %v1010
        %v1317 = vpack.c.b16 %v1020, %v1011
        %v1318 = vpack.c.b16 %v1030, %v1021
        %v1319 = vpack.c.b16 %v1031, %v1022
        %v1320 = vpack.c.b16 %v1032, %v1023
        %v1321 = vpack.c.b16 %v1033, %v1024
        %v1322 = vpack.c.b16 %v1034, %v1025
        %v1323 = vpack.c.b16 %v1035, %v1026
        %v1324 = vpack.c.b16 %v1036, %v1027
        %v1325 = vpack.c.b16 %v1037, %v1028
        %v1326 = vpack.c.b16 %v1038, %v1029
        %v1327 = vpack.c.b16 %v1048, %v1039
        %v1328 = vpack.c.b16 %v1049, %v1040
        %v1329 = vpack.c.b16 %v1050, %v1041
        %v1330 = vpack.c.b16 %v1051, %v1042
        %v1331 = vpack.c.b16 %v1052, %v1043
        %v1332 = vpack.c.b16 %v1053, %v1044
        %v1333 = vpack.c.b16 %v1054, %v1045
        %v1334 = vpack.c.b16 %v1055, %v1046
        %v1335 = vpack.c.b16 %v1056, %v1047
        %v1336 = vpack.c.b16 %v1066, %v1057
        %v1337 = vpack.c.b16 %v1067, %v1058
        %v1338 = vpack.c.b16 %v1068, %v1059
        %v1339 = vpack.c.b16 %v1069, %v1060
        %v1340 = vpack.c.b16 %v1070, %v1061
        %v1341 = vpack.c.b16 %v1071, %v1062
        %v1342 = vpack.c.b16 %v1072, %v1063
        %v1343 = vpack.c.b16 %v1073, %v1064
        %v1344 = vpack.c.b16 %v1074, %v1065
        %v1345 = vpack.c.b16 %v1084, %v1075
        %v1346 = vpack.c.b16 %v1085, %v1076
        %v1347 = vpack.c.b16 %v1086, %v1077
        %v1348 = vpack.c.b16 %v1087, %v1078
        %v1349 = vpack.c.b16 %v1088, %v1079
        %v1350 = vpack.c.b16 %v1089, %v1080
        %v1351 = vpack.c.b16 %v1090, %v1081
        %v1352 = vpack.c.b16 %v1091, %v1082
        %v1353 = vpack.c.b16 %v1092, %v1083
        %v1354 = vpack.c.b16 %v1102, %v1093
        %v1355 = vpack.c.b16 %v1103, %v1094
        %v1356 = vpack.c.b16 %v1104, %v1095
        %v1357 = vpack.c.b16 %v1105, %v1096
        %v1358 = vpack.c.b16 %v1106, %v1097
        %v1359 = vpack.c.b16 %v1107, %v1098
        %v1360 = vpack.c.b16 %v1108, %v1099
        %v1361 = vpack.c.b16 %v1109, %v1100
        %v1362 = vpack.c.b16 %v1110, %v1101
        %v1363 = vpack.c.b16 %v1120, %v1111
        %v1364 = vpack.c.b16 %v1121, %v1112
        %v1365 = vpack.c.b16 %v1122, %v1113
        %v1366 = vpack.c.b16 %v1123, %v1114
        %v1367 = vpack.c.b16 %v1124, %v1115
        %v1368 = vpack.c.b16 %v1125, %v1116
        %v1369 = vpack.c.b16 %v1126, %v1117
        %v1370 = vpack.c.b16 %v1127, %v1118
        %v1371 = vpack.c.b16 %v1128, %v1119
        %v1372 = vpack.c.b16 %v1138, %v1129
        %v1373 = vpack.c.b16 %v1139, %v1130
        %v1374 = vpack.c.b16 %v1140, %v1131
        %v1375 = vpack.c.b16 %v1141, %v1132
        %v1376 = vpack.c.b16 %v1142, %v1133
        %v1377 = vpack.c.b16 %v1143, %v1134
        %v1378 = vpack.c.b16 %v1144, %v1135
        %v1379 = vpack.c.b16 %v1145, %v1136
        %v1380 = vpack.c.b16 %v1146, %v1137
        %v1381 = vpack.c.b16 %v1156, %v1147
        %v1382 = vpack.c.b16 %v1157, %v1148
        %v1383 = vpack.c.b16 %v1158, %v1149
        %v1384 = vpack.c.b16 %v1159, %v1150
        %v1385 = vpack.c.b16 %v1160, %v1151
        %v1386 = vpack.c.b16 %v1161, %v1152
        %v1387 = vpack.c.b16 %v1162, %v1153
        %v1388 = vpack.c.b16 %v1163, %v1154
        %v1389 = vpack.c.b16 %v1164, %v1155
        %v1390 = vpack.c.b16 %v1174, %v1165
        %v1391 = vpack.c.b16 %v1175, %v1166
        %v1392 = vpack.c.b16 %v1176, %v1167
        %v1393 = vpack.c.b16 %v1177, %v1168
        %v1394 = vpack.c.b16 %v1178, %v1169
        %v1395 = vpack.c.b16 %v1179, %v1170
        %v1396 = vpack.c.b16 %v1180, %v1171
        %v1397 = vpack.c.b16 %v1181, %v1172
        %v1398 = vpack.c.b16 %v1182, %v1173
        %1615 = vmatpush.bf16.msra.mxu0 %v1246
        %1616 = vmatpush.bf16.msra.mxu0 %v1237
        %1617 = vmatpush.bf16.msra.mxu0 %v1228
        %1618 = vmatpush.bf16.msra.mxu0 %v1219
        %1619 = vmatpush.bf16.msra.mxu0 %v1210
        %1620 = vmatpush.bf16.msra.mxu0 %v1201
        %1621 = vmatpush.bf16.msra.mxu0 %v1192
        %1622 = vmatpush.bf16.msra.mxu0 %v1183
        %1623 = vmatmul.bf16.gmra.mxu0 %v268
        %v1624 = vpop.f32.mrf.mxu0
        %v1625 = vadd.f32 0.0, %v1624
        %v1626 = vpop.f32.mrf.mxu0
        %1627 = vdwg.mxu0
        %1628 = vmatpush.bf16.msra.mxu0 %v1318
        %1629 = vmatpush.bf16.msra.mxu0 %v1309
        %1630 = vmatpush.bf16.msra.mxu0 %v1300
        %1631 = vmatpush.bf16.msra.mxu0 %v1291
        %1632 = vmatpush.bf16.msra.mxu0 %v1282
        %1633 = vmatpush.bf16.msra.mxu0 %v1273
        %1634 = vmatpush.bf16.msra.mxu0 %v1264
        %1635 = vmatpush.bf16.msra.mxu0 %v1255
        %1636 = vmatmul.bf16.gmra.mxu0 %v269
        %v1637 = vpop.f32.mrf.mxu0
        %v1638 = vadd.f32 %v1625, %v1637
        %v1639 = vpop.f32.mrf.mxu0
        %1640 = vdwg.mxu0
        %1641 = vmatpush.bf16.msra.mxu0 %v1390
        %1642 = vmatpush.bf16.msra.mxu0 %v1381
        %1643 = vmatpush.bf16.msra.mxu0 %v1372
        %1644 = vmatpush.bf16.msra.mxu0 %v1363
        %1645 = vmatpush.bf16.msra.mxu0 %v1354
        %1646 = vmatpush.bf16.msra.mxu0 %v1345
        %1647 = vmatpush.bf16.msra.mxu0 %v1336
        %1648 = vmatpush.bf16.msra.mxu0 %v1327
        %1649 = vmatmul.bf16.gmra.mxu0 %v270
        %v1650 = vpop.f32.mrf.mxu0
        %v1651 = vadd.f32 %v1638, %v1650
        %v1652 = vpop.f32.mrf.mxu0
        %1653 = vdwg.mxu0
        %1654 = vmatpush.bf16.msra.mxu0 %v1247
        %1655 = vmatpush.bf16.msra.mxu0 %v1238
        %1656 = vmatpush.bf16.msra.mxu0 %v1229
        %1657 = vmatpush.bf16.msra.mxu0 %v1220
        %1658 = vmatpush.bf16.msra.mxu0 %v1211
        %1659 = vmatpush.bf16.msra.mxu0 %v1202
        %1660 = vmatpush.bf16.msra.mxu0 %v1193
        %1661 = vmatpush.bf16.msra.mxu0 %v1184
        %1662 = vmatmul.bf16.gmra.mxu0 %v268
        %v1663 = vpop.f32.mrf.mxu0
        %v1664 = vadd.f32 0.0, %v1663
        %v1665 = vpop.f32.mrf.mxu0
        %1666 = vdwg.mxu0
        %1667 = vmatpush.bf16.msra.mxu0 %v1319
        %1668 = vmatpush.bf16.msra.mxu0 %v1310
        %1669 = vmatpush.bf16.msra.mxu0 %v1301
        %1670 = vmatpush.bf16.msra.mxu0 %v1292
        %1671 = vmatpush.bf16.msra.mxu0 %v1283
        %1672 = vmatpush.bf16.msra.mxu0 %v1274
        %1673 = vmatpush.bf16.msra.mxu0 %v1265
        %1674 = vmatpush.bf16.msra.mxu0 %v1256
        %1675 = vmatmul.bf16.gmra.mxu0 %v269
        %v1676 = vpop.f32.mrf.mxu0
        %v1677 = vadd.f32 %v1664, %v1676
        %v1678 = vpop.f32.mrf.mxu0
        %1679 = vdwg.mxu0
        %1680 = vmatpush.bf16.msra.mxu0 %v1391
        %1681 = vmatpush.bf16.msra.mxu0 %v1382
        %1682 = vmatpush.bf16.msra.mxu0 %v1373
        %1683 = vmatpush.bf16.msra.mxu0 %v1364
        %1684 = vmatpush.bf16.msra.mxu0 %v1355
        %1685 = vmatpush.bf16.msra.mxu0 %v1346
        %1686 = vmatpush.bf16.msra.mxu0 %v1337
        %1687 = vmatpush.bf16.msra.mxu0 %v1328
        %1688 = vmatmul.bf16.gmra.mxu0 %v270
        %v1689 = vpop.f32.mrf.mxu0
        %v1690 = vadd.f32 %v1677, %v1689
        %v1691 = vpop.f32.mrf.mxu0
        %1692 = vdwg.mxu0
        %1693 = vmatpush.bf16.msra.mxu0 %v1248
        %1694 = vmatpush.bf16.msra.mxu0 %v1239
        %1695 = vmatpush.bf16.msra.mxu0 %v1230
        %1696 = vmatpush.bf16.msra.mxu0 %v1221
        %1697 = vmatpush.bf16.msra.mxu0 %v1212
        %1698 = vmatpush.bf16.msra.mxu0 %v1203
        %1699 = vmatpush.bf16.msra.mxu0 %v1194
        %1700 = vmatpush.bf16.msra.mxu0 %v1185
        %1701 = vmatmul.bf16.gmra.mxu0 %v268
        %v1702 = vpop.f32.mrf.mxu0
        %v1703 = vadd.f32 0.0, %v1702
        %v1704 = vpop.f32.mrf.mxu0
        %1705 = vdwg.mxu0
        %1706 = vmatpush.bf16.msra.mxu0 %v1320
        %1707 = vmatpush.bf16.msra.mxu0 %v1311
        %1708 = vmatpush.bf16.msra.mxu0 %v1302
        %1709 = vmatpush.bf16.msra.mxu0 %v1293
        %1710 = vmatpush.bf16.msra.mxu0 %v1284
        %1711 = vmatpush.bf16.msra.mxu0 %v1275
        %1712 = vmatpush.bf16.msra.mxu0 %v1266
        %1713 = vmatpush.bf16.msra.mxu0 %v1257
        %1714 = vmatmul.bf16.gmra.mxu0 %v269
        %v1715 = vpop.f32.mrf.mxu0
        %v1716 = vadd.f32 %v1703, %v1715
        %v1717 = vpop.f32.mrf.mxu0
        %1718 = vdwg.mxu0
        %1719 = vmatpush.bf16.msra.mxu0 %v1392
        %1720 = vmatpush.bf16.msra.mxu0 %v1383
        %1721 = vmatpush.bf16.msra.mxu0 %v1374
        %1722 = vmatpush.bf16.msra.mxu0 %v1365
        %1723 = vmatpush.bf16.msra.mxu0 %v1356
        %1724 = vmatpush.bf16.msra.mxu0 %v1347
        %1725 = vmatpush.bf16.msra.mxu0 %v1338
        %1726 = vmatpush.bf16.msra.mxu0 %v1329
        %1727 = vmatmul.bf16.gmra.mxu0 %v270
        %v1728 = vpop.f32.mrf.mxu0
        %v1729 = vadd.f32 %v1716, %v1728
        %v1730 = vpop.f32.mrf.mxu0
        %1731 = vdwg.mxu0
        %1732 = vmatpush.bf16.msra.mxu0 %v1249
        %1733 = vmatpush.bf16.msra.mxu0 %v1240
        %1734 = vmatpush.bf16.msra.mxu0 %v1231
        %1735 = vmatpush.bf16.msra.mxu0 %v1222
        %1736 = vmatpush.bf16.msra.mxu0 %v1213
        %1737 = vmatpush.bf16.msra.mxu0 %v1204
        %1738 = vmatpush.bf16.msra.mxu0 %v1195
        %1739 = vmatpush.bf16.msra.mxu0 %v1186
        %1740 = vmatmul.bf16.gmra.mxu0 %v268
        %v1741 = vpop.f32.mrf.mxu0
        %v1742 = vadd.f32 0.0, %v1741
        %v1743 = vpop.f32.mrf.mxu0
        %1744 = vdwg.mxu0
        %1745 = vmatpush.bf16.msra.mxu0 %v1321
        %1746 = vmatpush.bf16.msra.mxu0 %v1312
        %1747 = vmatpush.bf16.msra.mxu0 %v1303
        %1748 = vmatpush.bf16.msra.mxu0 %v1294
        %1749 = vmatpush.bf16.msra.mxu0 %v1285
        %1750 = vmatpush.bf16.msra.mxu0 %v1276
        %1751 = vmatpush.bf16.msra.mxu0 %v1267
        %1752 = vmatpush.bf16.msra.mxu0 %v1258
        %1753 = vmatmul.bf16.gmra.mxu0 %v269
        %v1754 = vpop.f32.mrf.mxu0
        %v1755 = vadd.f32 %v1742, %v1754
        %v1756 = vpop.f32.mrf.mxu0
        %1757 = vdwg.mxu0
        %1758 = vmatpush.bf16.msra.mxu0 %v1393
        %1759 = vmatpush.bf16.msra.mxu0 %v1384
        %1760 = vmatpush.bf16.msra.mxu0 %v1375
        %1761 = vmatpush.bf16.msra.mxu0 %v1366
        %1762 = vmatpush.bf16.msra.mxu0 %v1357
        %1763 = vmatpush.bf16.msra.mxu0 %v1348
        %1764 = vmatpush.bf16.msra.mxu0 %v1339
        %1765 = vmatpush.bf16.msra.mxu0 %v1330
        %1766 = vmatmul.bf16.gmra.mxu0 %v270
        %v1767 = vpop.f32.mrf.mxu0
        %v1768 = vadd.f32 %v1755, %v1767
        %v1769 = vpop.f32.mrf.mxu0
        %1770 = vdwg.mxu0
        %1771 = vmatpush.bf16.msra.mxu0 %v1250
        %1772 = vmatpush.bf16.msra.mxu0 %v1241
        %1773 = vmatpush.bf16.msra.mxu0 %v1232
        %1774 = vmatpush.bf16.msra.mxu0 %v1223
        %1775 = vmatpush.bf16.msra.mxu0 %v1214
        %1776 = vmatpush.bf16.msra.mxu0 %v1205
        %1777 = vmatpush.bf16.msra.mxu0 %v1196
        %1778 = vmatpush.bf16.msra.mxu0 %v1187
        %1779 = vmatmul.bf16.gmra.mxu0 %v268
        %v1780 = vpop.f32.mrf.mxu0
        %v1781 = vadd.f32 0.0, %v1780
        %v1782 = vpop.f32.mrf.mxu0
        %1783 = vdwg.mxu0
        %1784 = vmatpush.bf16.msra.mxu0 %v1322
        %1785 = vmatpush.bf16.msra.mxu0 %v1313
        %1786 = vmatpush.bf16.msra.mxu0 %v1304
        %1787 = vmatpush.bf16.msra.mxu0 %v1295
        %1788 = vmatpush.bf16.msra.mxu0 %v1286
        %1789 = vmatpush.bf16.msra.mxu0 %v1277
        %1790 = vmatpush.bf16.msra.mxu0 %v1268
        %1791 = vmatpush.bf16.msra.mxu0 %v1259
        %1792 = vmatmul.bf16.gmra.mxu0 %v269
        %v1793 = vpop.f32.mrf.mxu0
        %v1794 = vadd.f32 %v1781, %v1793
        %v1795 = vpop.f32.mrf.mxu0
        %1796 = vdwg.mxu0
        %1797 = vmatpush.bf16.msra.mxu0 %v1394
        %1798 = vmatpush.bf16.msra.mxu0 %v1385
        %1799 = vmatpush.bf16.msra.mxu0 %v1376
        %1800 = vmatpush.bf16.msra.mxu0 %v1367
        %1801 = vmatpush.bf16.msra.mxu0 %v1358
        %1802 = vmatpush.bf16.msra.mxu0 %v1349
        %1803 = vmatpush.bf16.msra.mxu0 %v1340
        %1804 = vmatpush.bf16.msra.mxu0 %v1331
        %1805 = vmatmul.bf16.gmra.mxu0 %v270
        %v1806 = vpop.f32.mrf.mxu0
        %v1807 = vadd.f32 %v1794, %v1806
        %v1808 = vpop.f32.mrf.mxu0
        %1809 = vdwg.mxu0
        %1810 = vmatpush.bf16.msra.mxu0 %v1251
        %1811 = vmatpush.bf16.msra.mxu0 %v1242
        %1812 = vmatpush.bf16.msra.mxu0 %v1233
        %1813 = vmatpush.bf16.msra.mxu0 %v1224
        %1814 = vmatpush.bf16.msra.mxu0 %v1215
        %1815 = vmatpush.bf16.msra.mxu0 %v1206
        %1816 = vmatpush.bf16.msra.mxu0 %v1197
        %1817 = vmatpush.bf16.msra.mxu0 %v1188
        %1818 = vmatmul.bf16.gmra.mxu0 %v268
        %v1819 = vpop.f32.mrf.mxu0
        %v1820 = vadd.f32 0.0, %v1819
        %v1821 = vpop.f32.mrf.mxu0
        %1822 = vdwg.mxu0
        %1823 = vmatpush.bf16.msra.mxu0 %v1323
        %1824 = vmatpush.bf16.msra.mxu0 %v1314
        %1825 = vmatpush.bf16.msra.mxu0 %v1305
        %1826 = vmatpush.bf16.msra.mxu0 %v1296
        %1827 = vmatpush.bf16.msra.mxu0 %v1287
        %1828 = vmatpush.bf16.msra.mxu0 %v1278
        %1829 = vmatpush.bf16.msra.mxu0 %v1269
        %1830 = vmatpush.bf16.msra.mxu0 %v1260
        %1831 = vmatmul.bf16.gmra.mxu0 %v269
        %v1832 = vpop.f32.mrf.mxu0
        %v1833 = vadd.f32 %v1820, %v1832
        %v1834 = vpop.f32.mrf.mxu0
        %1835 = vdwg.mxu0
        %1836 = vmatpush.bf16.msra.mxu0 %v1395
        %1837 = vmatpush.bf16.msra.mxu0 %v1386
        %1838 = vmatpush.bf16.msra.mxu0 %v1377
        %1839 = vmatpush.bf16.msra.mxu0 %v1368
        %1840 = vmatpush.bf16.msra.mxu0 %v1359
        %1841 = vmatpush.bf16.msra.mxu0 %v1350
        %1842 = vmatpush.bf16.msra.mxu0 %v1341
        %1843 = vmatpush.bf16.msra.mxu0 %v1332
        %1844 = vmatmul.bf16.gmra.mxu0 %v270
        %v1845 = vpop.f32.mrf.mxu0
        %v1846 = vadd.f32 %v1833, %v1845
        %v1847 = vpop.f32.mrf.mxu0
        %1848 = vdwg.mxu0
        %1849 = vmatpush.bf16.msra.mxu0 %v1252
        %1850 = vmatpush.bf16.msra.mxu0 %v1243
        %1851 = vmatpush.bf16.msra.mxu0 %v1234
        %1852 = vmatpush.bf16.msra.mxu0 %v1225
        %1853 = vmatpush.bf16.msra.mxu0 %v1216
        %1854 = vmatpush.bf16.msra.mxu0 %v1207
        %1855 = vmatpush.bf16.msra.mxu0 %v1198
        %1856 = vmatpush.bf16.msra.mxu0 %v1189
        %1857 = vmatmul.bf16.gmra.mxu0 %v268
        %v1858 = vpop.f32.mrf.mxu0
        %v1859 = vadd.f32 0.0, %v1858
        %v1860 = vpop.f32.mrf.mxu0
        %1861 = vdwg.mxu0
        %1862 = vmatpush.bf16.msra.mxu0 %v1324
        %1863 = vmatpush.bf16.msra.mxu0 %v1315
        %1864 = vmatpush.bf16.msra.mxu0 %v1306
        %1865 = vmatpush.bf16.msra.mxu0 %v1297
        %1866 = vmatpush.bf16.msra.mxu0 %v1288
        %1867 = vmatpush.bf16.msra.mxu0 %v1279
        %1868 = vmatpush.bf16.msra.mxu0 %v1270
        %1869 = vmatpush.bf16.msra.mxu0 %v1261
        %1870 = vmatmul.bf16.gmra.mxu0 %v269
        %v1871 = vpop.f32.mrf.mxu0
        %v1872 = vadd.f32 %v1859, %v1871
        %v1873 = vpop.f32.mrf.mxu0
        %1874 = vdwg.mxu0
        %1875 = vmatpush.bf16.msra.mxu0 %v1396
        %1876 = vmatpush.bf16.msra.mxu0 %v1387
        %1877 = vmatpush.bf16.msra.mxu0 %v1378
        %1878 = vmatpush.bf16.msra.mxu0 %v1369
        %1879 = vmatpush.bf16.msra.mxu0 %v1360
        %1880 = vmatpush.bf16.msra.mxu0 %v1351
        %1881 = vmatpush.bf16.msra.mxu0 %v1342
        %1882 = vmatpush.bf16.msra.mxu0 %v1333
        %1883 = vmatmul.bf16.gmra.mxu0 %v270
        %v1884 = vpop.f32.mrf.mxu0
        %v1885 = vadd.f32 %v1872, %v1884
        %v1886 = vpop.f32.mrf.mxu0
        %1887 = vdwg.mxu0
        %1888 = vmatpush.bf16.msra.mxu0 %v1253
        %1889 = vmatpush.bf16.msra.mxu0 %v1244
        %1890 = vmatpush.bf16.msra.mxu0 %v1235
        %1891 = vmatpush.bf16.msra.mxu0 %v1226
        %1892 = vmatpush.bf16.msra.mxu0 %v1217
        %1893 = vmatpush.bf16.msra.mxu0 %v1208
        %1894 = vmatpush.bf16.msra.mxu0 %v1199
        %1895 = vmatpush.bf16.msra.mxu0 %v1190
        %1896 = vmatmul.bf16.gmra.mxu0 %v268
        %v1897 = vpop.f32.mrf.mxu0
        %v1898 = vadd.f32 0.0, %v1897
        %v1899 = vpop.f32.mrf.mxu0
        %1900 = vdwg.mxu0
        %1901 = vmatpush.bf16.msra.mxu0 %v1325
        %1902 = vmatpush.bf16.msra.mxu0 %v1316
        %1903 = vmatpush.bf16.msra.mxu0 %v1307
        %1904 = vmatpush.bf16.msra.mxu0 %v1298
        %1905 = vmatpush.bf16.msra.mxu0 %v1289
        %1906 = vmatpush.bf16.msra.mxu0 %v1280
        %1907 = vmatpush.bf16.msra.mxu0 %v1271
        %1908 = vmatpush.bf16.msra.mxu0 %v1262
        %1909 = vmatmul.bf16.gmra.mxu0 %v269
        %v1910 = vpop.f32.mrf.mxu0
        %v1911 = vadd.f32 %v1898, %v1910
        %v1912 = vpop.f32.mrf.mxu0
        %1913 = vdwg.mxu0
        %1914 = vmatpush.bf16.msra.mxu0 %v1397
        %1915 = vmatpush.bf16.msra.mxu0 %v1388
        %1916 = vmatpush.bf16.msra.mxu0 %v1379
        %1917 = vmatpush.bf16.msra.mxu0 %v1370
        %1918 = vmatpush.bf16.msra.mxu0 %v1361
        %1919 = vmatpush.bf16.msra.mxu0 %v1352
        %1920 = vmatpush.bf16.msra.mxu0 %v1343
        %1921 = vmatpush.bf16.msra.mxu0 %v1334
        %1922 = vmatmul.bf16.gmra.mxu0 %v270
        %v1923 = vpop.f32.mrf.mxu0
        %v1924 = vadd.f32 %v1911, %v1923
        %v1925 = vpop.f32.mrf.mxu0
        %1926 = vdwg.mxu0
        %1927 = vmatpush.bf16.msra.mxu0 %v1254
        %1928 = vmatpush.bf16.msra.mxu0 %v1245
        %1929 = vmatpush.bf16.msra.mxu0 %v1236
        %1930 = vmatpush.bf16.msra.mxu0 %v1227
        %1931 = vmatpush.bf16.msra.mxu0 %v1218
        %1932 = vmatpush.bf16.msra.mxu0 %v1209
        %1933 = vmatpush.bf16.msra.mxu0 %v1200
        %1934 = vmatpush.bf16.msra.mxu0 %v1191
        %1935 = vmatmul.bf16.gmra.mxu0 %v268
        %v1936 = vpop.f32.mrf.mxu0
        %v1937 = vadd.f32 0.0, %v1936
        %v1938 = vpop.f32.mrf.mxu0
        %1939 = vdwg.mxu0
        %1940 = vmatpush.bf16.msra.mxu0 %v1326
        %1941 = vmatpush.bf16.msra.mxu0 %v1317
        %1942 = vmatpush.bf16.msra.mxu0 %v1308
        %1943 = vmatpush.bf16.msra.mxu0 %v1299
        %1944 = vmatpush.bf16.msra.mxu0 %v1290
        %1945 = vmatpush.bf16.msra.mxu0 %v1281
        %1946 = vmatpush.bf16.msra.mxu0 %v1272
        %1947 = vmatpush.bf16.msra.mxu0 %v1263
        %1948 = vmatmul.bf16.gmra.mxu0 %v269
        %v1949 = vpop.f32.mrf.mxu0
        %v1950 = vadd.f32 %v1937, %v1949
        %v1951 = vpop.f32.mrf.mxu0
        %1952 = vdwg.mxu0
        %1953 = vmatpush.bf16.msra.mxu0 %v1398
        %1954 = vmatpush.bf16.msra.mxu0 %v1389
        %1955 = vmatpush.bf16.msra.mxu0 %v1380
        %1956 = vmatpush.bf16.msra.mxu0 %v1371
        %1957 = vmatpush.bf16.msra.mxu0 %v1362
        %1958 = vmatpush.bf16.msra.mxu0 %v1353
        %1959 = vmatpush.bf16.msra.mxu0 %v1344
        %1960 = vmatpush.bf16.msra.mxu0 %v1335
        %1961 = vmatmul.bf16.gmra.mxu0 %v270
        %v1962 = vpop.f32.mrf.mxu0
        %v1963 = vadd.f32 %v1950, %v1962
        %v1964 = vpop.f32.mrf.mxu0
        %1965 = vdwg.mxu0
        %v1966 = vpack.c.bf16 %v1690, %v1651
        %v1967 = vpack.c.bf16 %v1729, %v1729
        %v1968 = vpack.c.bf16 %v1807, %v1768
        %v1969 = vpack.c.bf16 %v1846, %v1846
        %v1970 = vpack.c.bf16 %v1924, %v1885
        %v1971 = vpack.c.bf16 %v1963, %v1963
        %v1972 = vlaneseq
        %v1973 = vshrl.u32 %v1972, 7
        %v1974 = vlaneseq
        %v1975 = vand.u32 %v1974, 127
        %vm1976 = vcmp.le.s32.totalorder %v1975, %v1973
        %vm1977 = vcmask 523264
        %v1979 = vsel %vm1977, %v1966, 0
        %v1982 = vsel %vm1977, %v1968, 0
        %1984 = vmatpush.bf16.xpose.msra.mxu0 0
        %1985 = vmatpush.bf16.xpose.msra.mxu0 0
        %1986 = vmatpush.bf16.xpose.msra.mxu0 0
        %1987 = vmatpush.bf16.xpose.msra.mxu0 0
        %1988 = vmatpush.bf16.xpose.msra.mxu0 0
        %1989 = vmatpush.bf16.xpose.msra.mxu0 0
        %1990 = vmatpush.bf16.xpose.msra.mxu0 0
        %1991 = vmatpush.bf16.xpose.msra.mxu0 %v1982
        %1992 = vmatmul.bf16.gmra.mxu0 %v1979
        %v1993 = vpop.f32.mrf.mxu0
        %v1994 = vadd.f32 0.0, %v1993
        %v1995 = vpop.f32.mrf.mxu0
        %1996 = vdwg.mxu0
        %v1997 = vsel %vm1976, %v1994, -inf
        %vm1998 = vcmask 64512
        %v1999 = vsel %vm1998, %v1997, -inf
        %2000 = vmax.xlane.f32.xlu0 %v1999
        %v2001 = vpop.xlane.xlu0 %2000
        %v2002 = vsub.f32 %v1997, %v2001
        %v2003 = vmul.f32 %v2002, 1.442695
        %v2004 = vpow.pop %v2003
        %v2005 = vsel %vm1998, %v2004, 0.0
        %2006 = vadd.xlane.f32.xlu0 %v2005
        %v2007 = vpop.xlane.xlu0 %2006
        %v2008 = vrcp.pop %v2007
        %v2009 = vmul.f32 %v2004, %v2008
        %v2010 = vpack.c.bf16 %v2009, %v2009
        %v2012 = vsel %vm1998, %v2010, 0
        %vm2014 = vcmask 1043456
        %v2016 = vsel %vm2014, %v1970, 0
        %2018 = vmatpush.bf16.msra.mxu0 0
        %2019 = vmatpush.bf16.msra.mxu0 0
        %2020 = vmatpush.bf16.msra.mxu0 0
        %2021 = vmatpush.bf16.msra.mxu0 0
        %2022 = vmatpush.bf16.msra.mxu0 0
        %2023 = vmatpush.bf16.msra.mxu0 0
        %2024 = vmatpush.bf16.msra.mxu0 0
        %2025 = vmatpush.bf16.msra.mxu0 %v2016
        %2026 = vmatmul.bf16.gmra.mxu0 %v2012
        %v2027 = vpop.f32.mrf.mxu0
        %v2028 = vadd.f32 0.0, %v2027
        %v2029 = vpop.f32.mrf.mxu0
        %2030 = vdwg.mxu0
        %v2031 = vpack.c.bf16 %v2028, %v2028
        %v2033 = vunpack.c.l.b16 %v1966
        %v2034 = vpack.c.b16 %v2033, %v2033
        %2035 = vrot.lane.b32.xlu0 %v2034, 64
        %v2036 = vpop.permute.xlu0 %2035
        %v2038 = vunpack.c.l.b16 %v1968
        %v2039 = vpack.c.b16 %v2038, %v2038
        %2040 = vrot.lane.b32.xlu0 %v2039, 64
        %v2041 = vpop.permute.xlu0 %2040
        %v2043 = vsel %vm1977, %v2036, 0
        %v2046 = vsel %vm1977, %v2041, 0
        %2048 = vmatpush.bf16.xpose.msra.mxu0 0
        %2049 = vmatpush.bf16.xpose.msra.mxu0 0
        %2050 = vmatpush.bf16.xpose.msra.mxu0 0
        %2051 = vmatpush.bf16.xpose.msra.mxu0 0
        %2052 = vmatpush.bf16.xpose.msra.mxu0 0
        %2053 = vmatpush.bf16.xpose.msra.mxu0 0
        %2054 = vmatpush.bf16.xpose.msra.mxu0 0
        %2055 = vmatpush.bf16.xpose.msra.mxu0 %v2046
        %2056 = vmatmul.bf16.gmra.mxu0 %v2043
        %v2057 = vpop.f32.mrf.mxu0
        %v2058 = vadd.f32 0.0, %v2057
        %v2059 = vpop.f32.mrf.mxu0
        %2060 = vdwg.mxu0
        %v2061 = vsel %vm1976, %v2058, -inf
        %v2062 = vsel %vm1998, %v2061, -inf
        %2063 = vmax.xlane.f32.xlu0 %v2062
        %v2064 = vpop.xlane.xlu0 %2063
        %v2065 = vsub.f32 %v2061, %v2064
        %v2066 = vmul.f32 %v2065, 1.442695
        %v2067 = vpow.pop %v2066
        %v2068 = vsel %vm1998, %v2067, 0.0
        %2069 = vadd.xlane.f32.xlu0 %v2068
        %v2070 = vpop.xlane.xlu0 %2069
        %v2071 = vrcp.pop %v2070
        %v2072 = vmul.f32 %v2067, %v2071
        %v2073 = vpack.c.bf16 %v2072, %v2072
        %v2075 = vunpack.c.l.b16 %v1970
        %v2076 = vpack.c.b16 %v2075, %v2075
        %2077 = vrot.lane.b32.xlu0 %v2076, 64
        %v2078 = vpop.permute.xlu0 %2077
        %v2080 = vsel %vm1998, %v2073, 0
        %v2083 = vsel %vm2014, %v2078, 0
        %2085 = vmatpush.bf16.msra.mxu0 0
        %2086 = vmatpush.bf16.msra.mxu0 0
        %2087 = vmatpush.bf16.msra.mxu0 0
        %2088 = vmatpush.bf16.msra.mxu0 0
        %2089 = vmatpush.bf16.msra.mxu0 0
        %2090 = vmatpush.bf16.msra.mxu0 0
        %2091 = vmatpush.bf16.msra.mxu0 0
        %2092 = vmatpush.bf16.msra.mxu0 %v2083
        %2093 = vmatmul.bf16.gmra.mxu0 %v2080
        %v2094 = vpop.f32.mrf.mxu0
        %v2095 = vadd.f32 0.0, %v2094
        %v2096 = vpop.f32.mrf.mxu0
        %2097 = vdwg.mxu0
        %v2098 = vpack.c.bf16 %v2095, %v2095
        %v2099 = vunpack.c.h.b16 %v1966
        %v2100 = vpack.c.b16 %v2099, %v2099
        %v2101 = vunpack.c.h.b16 %v1968
        %v2102 = vpack.c.b16 %v2101, %v2101
        %v2104 = vsel %vm1977, %v2100, 0
        %v2107 = vsel %vm1977, %v2102, 0
        %2109 = vmatpush.bf16.xpose.msra.mxu0 0
        %2110 = vmatpush.bf16.xpose.msra.mxu0 0
        %2111 = vmatpush.bf16.xpose.msra.mxu0 0
        %2112 = vmatpush.bf16.xpose.msra.mxu0 0
        %2113 = vmatpush.bf16.xpose.msra.mxu0 0
        %2114 = vmatpush.bf16.xpose.msra.mxu0 0
        %2115 = vmatpush.bf16.xpose.msra.mxu0 0
        %2116 = vmatpush.bf16.xpose.msra.mxu0 %v2107
        %2117 = vmatmul.bf16.gmra.mxu0 %v2104
        %v2118 = vpop.f32.mrf.mxu0
        %v2119 = vadd.f32 0.0, %v2118
        %v2120 = vpop.f32.mrf.mxu0
        %2121 = vdwg.mxu0
        %v2122 = vsel %vm1976, %v2119, -inf
        %v2123 = vsel %vm1998, %v2122, -inf
        %2124 = vmax.xlane.f32.xlu0 %v2123
        %v2125 = vpop.xlane.xlu0 %2124
        %v2126 = vsub.f32 %v2122, %v2125
        %v2127 = vmul.f32 %v2126, 1.442695
        %v2128 = vpow.pop %v2127
        %v2129 = vsel %vm1998, %v2128, 0.0
        %2130 = vadd.xlane.f32.xlu0 %v2129
        %v2131 = vpop.xlane.xlu0 %2130
        %v2132 = vrcp.pop %v2131
        %v2133 = vmul.f32 %v2128, %v2132
        %v2134 = vpack.c.bf16 %v2133, %v2133
        %v2135 = vunpack.c.h.b16 %v1970
        %v2136 = vpack.c.b16 %v2135, %v2135
        %v2138 = vsel %vm1998, %v2134, 0
        %v2141 = vsel %vm2014, %v2136, 0
        %2143 = vmatpush.bf16.msra.mxu0 0
        %2144 = vmatpush.bf16.msra.mxu0 0
        %2145 = vmatpush.bf16.msra.mxu0 0
        %2146 = vmatpush.bf16.msra.mxu0 0
        %2147 = vmatpush.bf16.msra.mxu0 0
        %2148 = vmatpush.bf16.msra.mxu0 0
        %2149 = vmatpush.bf16.msra.mxu0 0
        %2150 = vmatpush.bf16.msra.mxu0 %v2141
        %2151 = vmatmul.bf16.gmra.mxu0 %v2138
        %v2152 = vpop.f32.mrf.mxu0
        %v2153 = vadd.f32 0.0, %v2152
        %v2154 = vpop.f32.mrf.mxu0
        %2155 = vdwg.mxu0
        %v2156 = vpack.c.bf16 %v2153, %v2153
        %2157 = vrot.lane.b32.xlu0 %v2100, 64
        %v2158 = vpop.permute.xlu0 %2157
        %2159 = vrot.lane.b32.xlu0 %v2102, 64
        %v2160 = vpop.permute.xlu0 %2159
        %v2162 = vsel %vm1977, %v2158, 0
        %v2165 = vsel %vm1977, %v2160, 0
        %2167 = vmatpush.bf16.xpose.msra.mxu0 0
        %2168 = vmatpush.bf16.xpose.msra.mxu0 0
        %2169 = vmatpush.bf16.xpose.msra.mxu0 0
        %2170 = vmatpush.bf16.xpose.msra.mxu0 0
        %2171 = vmatpush.bf16.xpose.msra.mxu0 0
        %2172 = vmatpush.bf16.xpose.msra.mxu0 0
        %2173 = vmatpush.bf16.xpose.msra.mxu0 0
        %2174 = vmatpush.bf16.xpose.msra.mxu0 %v2165
        %2175 = vmatmul.bf16.gmra.mxu0 %v2162
        %v2176 = vpop.f32.mrf.mxu0
        %v2177 = vadd.f32 0.0, %v2176
        %v2178 = vpop.f32.mrf.mxu0
        %2179 = vdwg.mxu0
        %v2180 = vsel %vm1976, %v2177, -inf
        %v2181 = vsel %vm1998, %v2180, -inf
        %2182 = vmax.xlane.f32.xlu0 %v2181
        %v2183 = vpop.xlane.xlu0 %2182
        %v2184 = vsub.f32 %v2180, %v2183
        %v2185 = vmul.f32 %v2184, 1.442695
        %v2186 = vpow.pop %v2185
        %v2187 = vsel %vm1998, %v2186, 0.0
        %2188 = vadd.xlane.f32.xlu0 %v2187
        %v2189 = vpop.xlane.xlu0 %2188
        %v2190 = vrcp.pop %v2189
        %v2191 = vmul.f32 %v2186, %v2190
        %v2192 = vpack.c.bf16 %v2191, %v2191
        %2193 = vrot.lane.b32.xlu0 %v2136, 64
        %v2194 = vpop.permute.xlu0 %2193
        %v2196 = vsel %vm1998, %v2192, 0
        %v2199 = vsel %vm2014, %v2194, 0
        %2201 = vmatpush.bf16.msra.mxu0 0
        %2202 = vmatpush.bf16.msra.mxu0 0
        %2203 = vmatpush.bf16.msra.mxu0 0
        %2204 = vmatpush.bf16.msra.mxu0 0
        %2205 = vmatpush.bf16.msra.mxu0 0
        %2206 = vmatpush.bf16.msra.mxu0 0
        %2207 = vmatpush.bf16.msra.mxu0 0
        %2208 = vmatpush.bf16.msra.mxu0 %v2199
        %2209 = vmatmul.bf16.gmra.mxu0 %v2196
        %v2210 = vpop.f32.mrf.mxu0
        %v2211 = vadd.f32 0.0, %v2210
        %v2212 = vpop.f32.mrf.mxu0
        %2213 = vdwg.mxu0
        %v2214 = vpack.c.bf16 %v2211, %v2211
        %v2216 = vsel %vm1977, %v1967, 0
        %v2219 = vsel %vm1977, %v1969, 0
        %2221 = vmatpush.bf16.xpose.msra.mxu0 0
        %2222 = vmatpush.bf16.xpose.msra.mxu0 0
        %2223 = vmatpush.bf16.xpose.msra.mxu0 0
        %2224 = vmatpush.bf16.xpose.msra.mxu0 0
        %2225 = vmatpush.bf16.xpose.msra.mxu0 0
        %2226 = vmatpush.bf16.xpose.msra.mxu0 0
        %2227 = vmatpush.bf16.xpose.msra.mxu0 0
        %2228 = vmatpush.bf16.xpose.msra.mxu0 %v2219
        %2229 = vmatmul.bf16.gmra.mxu0 %v2216
        %v2230 = vpop.f32.mrf.mxu0
        %v2231 = vadd.f32 0.0, %v2230
        %v2232 = vpop.f32.mrf.mxu0
        %2233 = vdwg.mxu0
        %v2234 = vsel %vm1976, %v2231, -inf
        %v2235 = vsel %vm1998, %v2234, -inf
        %2236 = vmax.xlane.f32.xlu0 %v2235
        %v2237 = vpop.xlane.xlu0 %2236
        %v2238 = vsub.f32 %v2234, %v2237
        %v2239 = vmul.f32 %v2238, 1.442695
        %v2240 = vpow.pop %v2239
        %v2241 = vsel %vm1998, %v2240, 0.0
        %2242 = vadd.xlane.f32.xlu0 %v2241
        %v2243 = vpop.xlane.xlu0 %2242
        %v2244 = vrcp.pop %v2243
        %v2245 = vmul.f32 %v2240, %v2244
        %v2246 = vpack.c.bf16 %v2245, %v2245
        %v2248 = vsel %vm1998, %v2246, 0
        %v2251 = vsel %vm2014, %v1971, 0
        %2253 = vmatpush.bf16.msra.mxu0 0
        %2254 = vmatpush.bf16.msra.mxu0 0
        %2255 = vmatpush.bf16.msra.mxu0 0
        %2256 = vmatpush.bf16.msra.mxu0 0
        %2257 = vmatpush.bf16.msra.mxu0 0
        %2258 = vmatpush.bf16.msra.mxu0 0
        %2259 = vmatpush.bf16.msra.mxu0 0
        %2260 = vmatpush.bf16.msra.mxu0 %v2251
        %2261 = vmatmul.bf16.gmra.mxu0 %v2248
        %v2262 = vpop.f32.mrf.mxu0
        %v2263 = vadd.f32 0.0, %v2262
        %v2264 = vpop.f32.mrf.mxu0
        %2265 = vdwg.mxu0
        %v2266 = vpack.c.bf16 %v2263, %v2263
        %v2268 = vunpack.c.l.b16 %v1967
        %v2269 = vpack.c.b16 %v2268, %v2268
        %2270 = vrot.lane.b32.xlu0 %v2269, 64
        %v2271 = vpop.permute.xlu0 %2270
        %v2273 = vunpack.c.l.b16 %v1969
        %v2274 = vpack.c.b16 %v2273, %v2273
        %2275 = vrot.lane.b32.xlu0 %v2274, 64
        %v2276 = vpop.permute.xlu0 %2275
        %v2278 = vsel %vm1977, %v2271, 0
        %v2281 = vsel %vm1977, %v2276, 0
        %2283 = vmatpush.bf16.xpose.msra.mxu0 0
        %2284 = vmatpush.bf16.xpose.msra.mxu0 0
        %2285 = vmatpush.bf16.xpose.msra.mxu0 0
        %2286 = vmatpush.bf16.xpose.msra.mxu0 0
        %2287 = vmatpush.bf16.xpose.msra.mxu0 0
        %2288 = vmatpush.bf16.xpose.msra.mxu0 0
        %2289 = vmatpush.bf16.xpose.msra.mxu0 0
        %2290 = vmatpush.bf16.xpose.msra.mxu0 %v2281
        %2291 = vmatmul.bf16.gmra.mxu0 %v2278
        %v2292 = vpop.f32.mrf.mxu0
        %v2293 = vadd.f32 0.0, %v2292
        %v2294 = vpop.f32.mrf.mxu0
        %2295 = vdwg.mxu0
        %v2296 = vsel %vm1976, %v2293, -inf
        %v2297 = vsel %vm1998, %v2296, -inf
        %2298 = vmax.xlane.f32.xlu0 %v2297
        %v2299 = vpop.xlane.xlu0 %2298
        %v2300 = vsub.f32 %v2296, %v2299
        %v2301 = vmul.f32 %v2300, 1.442695
        %v2302 = vpow.pop %v2301
        %v2303 = vsel %vm1998, %v2302, 0.0
        %2304 = vadd.xlane.f32.xlu0 %v2303
        %v2305 = vpop.xlane.xlu0 %2304
        %v2306 = vrcp.pop %v2305
        %v2307 = vmul.f32 %v2302, %v2306
        %v2308 = vpack.c.bf16 %v2307, %v2307
        %v2310 = vunpack.c.l.b16 %v1971
        %v2311 = vpack.c.b16 %v2310, %v2310
        %2312 = vrot.lane.b32.xlu0 %v2311, 64
        %v2313 = vpop.permute.xlu0 %2312
        %v2315 = vsel %vm1998, %v2308, 0
        %v2318 = vsel %vm2014, %v2313, 0
        %2320 = vmatpush.bf16.msra.mxu0 0
        %2321 = vmatpush.bf16.msra.mxu0 0
        %2322 = vmatpush.bf16.msra.mxu0 0
        %2323 = vmatpush.bf16.msra.mxu0 0
        %2324 = vmatpush.bf16.msra.mxu0 0
        %2325 = vmatpush.bf16.msra.mxu0 0
        %2326 = vmatpush.bf16.msra.mxu0 0
        %2327 = vmatpush.bf16.msra.mxu0 %v2318
        %2328 = vmatmul.bf16.gmra.mxu0 %v2315
        %v2329 = vpop.f32.mrf.mxu0
        %v2330 = vadd.f32 0.0, %v2329
        %v2331 = vpop.f32.mrf.mxu0
        %2332 = vdwg.mxu0
        %v2333 = vpack.c.bf16 %v2330, %v2330
        %v2335 = vunpack.c.l.b16 %v2098
        %v2336 = vpack.c.b16 %v2335, %v2335
        %2337 = vrot.lane.b32.xlu0 %v2336, 64
        %v2338 = vpop.permute.xlu0 %2337
        %v2340 = vunpack.c.l.b16 %v2214
        %v2341 = vpack.c.b16 %v2340, %v2340
        %2342 = vrot.lane.b32.xlu0 %v2341, 64
        %v2343 = vpop.permute.xlu0 %2342
        %v2345 = vunpack.c.l.b16 %v2333
        %v2346 = vpack.c.b16 %v2345, %v2345
        %2347 = vrot.lane.b32.xlu0 %v2346, 64
        %v2348 = vpop.permute.xlu0 %2347
        %v2351 = vsel %vm1977, %v2031, %v2338
        %v2355 = vsel %vm1977, %v2156, %v2343
        %v2359 = vsel %vm1977, %v2266, %v2348
        %v2361 = vld [vmem:[#allocation7] sm:$0xff]
        %v2362 = vld [vmem:[#allocation7 + $0x8] sm:$0xf]
        %v2363 = vld [vmem:[#allocation7 + $0xc] sm:$0xff]
        %v2364 = vld [vmem:[#allocation7 + $0x14] sm:$0xf]
        %v2365 = vld [vmem:[#allocation7 + $0x18] sm:$0xff]
        %v2366 = vld [vmem:[#allocation7 + $0x20] sm:$0xf]
        %v2367 = vld [vmem:[#allocation7 + $0x24] sm:$0xff]
        %v2368 = vld [vmem:[#allocation7 + $0x2c] sm:$0xf]
        %v2369 = vld [vmem:[#allocation7 + $0x30] sm:$0xff]
        %v2370 = vld [vmem:[#allocation7 + $0x38] sm:$0xf]
        %v2371 = vld [vmem:[#allocation7 + $0x3c] sm:$0xff]
        %v2372 = vld [vmem:[#allocation7 + $0x44] sm:$0xf]
        %v2373 = vld [vmem:[#allocation7 + $0x48] sm:$0xff]
        %v2374 = vld [vmem:[#allocation7 + $0x50] sm:$0xf]
        %v2375 = vld [vmem:[#allocation7 + $0x54] sm:$0xff]
        %v2376 = vld [vmem:[#allocation7 + $0x5c] sm:$0xf]
        %v2377 = vld [vmem:[#allocation7 + $0x60] sm:$0xff]
        %v2378 = vld [vmem:[#allocation7 + $0x68] sm:$0xf]
        %v2379 = vld [vmem:[#allocation7 + $0x6c] sm:$0xff]
        %v2380 = vld [vmem:[#allocation7 + $0x74] sm:$0xf]
        %v2381 = vld [vmem:[#allocation7 + $0x78] sm:$0xff]
        %v2382 = vld [vmem:[#allocation7 + $0x80] sm:$0xf]
        %v2383 = vld [vmem:[#allocation7 + $0x84] sm:$0xff]
        %v2384 = vld [vmem:[#allocation7 + $0x8c] sm:$0xf]
        %v2385 = vld [vmem:[#allocation7 + $0x90] sm:$0xff]
        %v2386 = vld [vmem:[#allocation7 + $0x98] sm:$0xf]
        %v2387 = vld [vmem:[#allocation7 + $0x9c] sm:$0xff]
        %v2388 = vld [vmem:[#allocation7 + $0xa4] sm:$0xf]
        %v2389 = vld [vmem:[#allocation7 + $0xa8] sm:$0xff]
        %v2390 = vld [vmem:[#allocation7 + $0xb0] sm:$0xf]
        %v2391 = vld [vmem:[#allocation7 + $0xb4] sm:$0xff]
        %v2392 = vld [vmem:[#allocation7 + $0xbc] sm:$0xf]
        %v2393 = vld [vmem:[#allocation7 + $0xc0] sm:$0xff]
        %v2394 = vld [vmem:[#allocation7 + $0xc8] sm:$0xf]
        %v2395 = vld [vmem:[#allocation7 + $0xcc] sm:$0xff]
        %v2396 = vld [vmem:[#allocation7 + $0xd4] sm:$0xf]
        %v2397 = vld [vmem:[#allocation7 + $0xd8] sm:$0xff]
        %v2398 = vld [vmem:[#allocation7 + $0xe0] sm:$0xf]
        %v2399 = vld [vmem:[#allocation7 + $0xe4] sm:$0xff]
        %v2400 = vld [vmem:[#allocation7 + $0xec] sm:$0xf]
        %v2401 = vld [vmem:[#allocation7 + $0xf0] sm:$0xff]
        %v2402 = vld [vmem:[#allocation7 + $0xf8] sm:$0xf]
        %v2403 = vld [vmem:[#allocation7 + $0xfc] sm:$0xff]
        %v2404 = vld [vmem:[#allocation7 + $0x104] sm:$0xf]
        %v2405 = vld [vmem:[#allocation7 + $0x108] sm:$0xff]
        %v2406 = vld [vmem:[#allocation7 + $0x110] sm:$0xf]
        %v2407 = vld [vmem:[#allocation7 + $0x114] sm:$0xff]
        %v2408 = vld [vmem:[#allocation7 + $0x11c] sm:$0xf]
        %v2409 = vld [vmem:[#allocation7 + $0x120] sm:$0xff]
        %v2410 = vld [vmem:[#allocation7 + $0x128] sm:$0xf]
        %v2411 = vld [vmem:[#allocation7 + $0x12c] sm:$0xff]
        %v2412 = vld [vmem:[#allocation7 + $0x134] sm:$0xf]
        %v2413 = vld [vmem:[#allocation7 + $0x138] sm:$0xff]
        %v2414 = vld [vmem:[#allocation7 + $0x140] sm:$0xf]
        %v2415 = vld [vmem:[#allocation7 + $0x144] sm:$0xff]
        %v2416 = vld [vmem:[#allocation7 + $0x14c] sm:$0xf]
        %v2417 = vld [vmem:[#allocation7 + $0x150] sm:$0xff]
        %v2418 = vld [vmem:[#allocation7 + $0x158] sm:$0xf]
        %v2419 = vld [vmem:[#allocation7 + $0x15c] sm:$0xff]
        %v2420 = vld [vmem:[#allocation7 + $0x164] sm:$0xf]
        %v2421 = vld [vmem:[#allocation7 + $0x168] sm:$0xff]
        %v2422 = vld [vmem:[#allocation7 + $0x170] sm:$0xf]
        %v2423 = vld [vmem:[#allocation7 + $0x174] sm:$0xff]
        %v2424 = vld [vmem:[#allocation7 + $0x17c] sm:$0xf]
        %v2425 = vld [vmem:[#allocation7 + $0x180] sm:$0xff]
        %v2426 = vld [vmem:[#allocation7 + $0x188] sm:$0xf]
        %v2427 = vld [vmem:[#allocation7 + $0x18c] sm:$0xff]
        %v2428 = vld [vmem:[#allocation7 + $0x194] sm:$0xf]
        %v2429 = vld [vmem:[#allocation7 + $0x198] sm:$0xff]
        %v2430 = vld [vmem:[#allocation7 + $0x1a0] sm:$0xf]
        %v2431 = vld [vmem:[#allocation7 + $0x1a4] sm:$0xff]
        %v2432 = vld [vmem:[#allocation7 + $0x1ac] sm:$0xf]
        %v2433 = vld [vmem:[#allocation7 + $0x1b0] sm:$0xff]
        %v2434 = vld [vmem:[#allocation7 + $0x1b8] sm:$0xf]
        %v2435 = vld [vmem:[#allocation7 + $0x1bc] sm:$0xff]
        %v2436 = vld [vmem:[#allocation7 + $0x1c4] sm:$0xf]
        %v2437 = vld [vmem:[#allocation7 + $0x1c8] sm:$0xff]
        %v2438 = vld [vmem:[#allocation7 + $0x1d0] sm:$0xf]
        %v2439 = vld [vmem:[#allocation7 + $0x1d4] sm:$0xff]
        %v2440 = vld [vmem:[#allocation7 + $0x1dc] sm:$0xf]
        %v2441 = vld [vmem:[#allocation7 + $0x1e0] sm:$0xff]
        %v2442 = vld [vmem:[#allocation7 + $0x1e8] sm:$0xf]
        %v2443 = vld [vmem:[#allocation7 + $0x1ec] sm:$0xff]
        %v2444 = vld [vmem:[#allocation7 + $0x1f4] sm:$0xf]
        %v2445 = vld [vmem:[#allocation7 + $0x1f8] sm:$0xff]
        %v2446 = vld [vmem:[#allocation7 + $0x200] sm:$0xf]
        %v2447 = vld [vmem:[#allocation7 + $0x204] sm:$0xff]
        %v2448 = vld [vmem:[#allocation7 + $0x20c] sm:$0xf]
        %v2449 = vld [vmem:[#allocation7 + $0x210] sm:$0xff]
        %v2450 = vld [vmem:[#allocation7 + $0x218] sm:$0xf]
        %v2451 = vld [vmem:[#allocation7 + $0x21c] sm:$0xff]
        %v2452 = vld [vmem:[#allocation7 + $0x224] sm:$0xf]
        %v2453 = vld [vmem:[#allocation7 + $0x228] sm:$0xff]
        %v2454 = vld [vmem:[#allocation7 + $0x230] sm:$0xf]
        %v2455 = vld [vmem:[#allocation7 + $0x234] sm:$0xff]
        %v2456 = vld [vmem:[#allocation7 + $0x23c] sm:$0xf]
        %v2457 = vld [vmem:[#allocation8] sm:$0x7]
        %v2459 = vperm.slane %v2457, 0
        %v2460 = vperm.slane %v2457, 1
        %v2461 = vperm.slane %v2457, 2
        %v2561 = vunpack.c.l.b16 %v2361
        %v2562 = vunpack.c.h.b16 %v2361
        %v2563 = vunpack.c.l.b16 %v2362
        %v2564 = vunpack.c.l.b16 %v2363
        %v2565 = vunpack.c.h.b16 %v2363
        %v2566 = vunpack.c.l.b16 %v2364
        %v2567 = vunpack.c.l.b16 %v2365
        %v2568 = vunpack.c.h.b16 %v2365
        %v2569 = vunpack.c.l.b16 %v2366
        %v2570 = vunpack.c.l.b16 %v2367
        %v2571 = vunpack.c.h.b16 %v2367
        %v2572 = vunpack.c.l.b16 %v2368
        %v2573 = vunpack.c.l.b16 %v2369
        %v2574 = vunpack.c.h.b16 %v2369
        %v2575 = vunpack.c.l.b16 %v2370
        %v2576 = vunpack.c.l.b16 %v2371
        %v2577 = vunpack.c.h.b16 %v2371
        %v2578 = vunpack.c.l.b16 %v2372
        %v2579 = vunpack.c.l.b16 %v2373
        %v2580 = vunpack.c.h.b16 %v2373
        %v2581 = vunpack.c.l.b16 %v2374
        %v2582 = vunpack.c.l.b16 %v2375
        %v2583 = vunpack.c.h.b16 %v2375
        %v2584 = vunpack.c.l.b16 %v2376
        %v2585 = vunpack.c.l.b16 %v2377
        %v2586 = vunpack.c.h.b16 %v2377
        %v2587 = vunpack.c.l.b16 %v2378
        %v2588 = vunpack.c.l.b16 %v2379
        %v2589 = vunpack.c.h.b16 %v2379
        %v2590 = vunpack.c.l.b16 %v2380
        %v2591 = vunpack.c.l.b16 %v2381
        %v2592 = vunpack.c.h.b16 %v2381
        %v2593 = vunpack.c.l.b16 %v2382
        %v2594 = vunpack.c.l.b16 %v2383
        %v2595 = vunpack.c.h.b16 %v2383
        %v2596 = vunpack.c.l.b16 %v2384
        %v2597 = vunpack.c.l.b16 %v2385
        %v2598 = vunpack.c.h.b16 %v2385
        %v2599 = vunpack.c.l.b16 %v2386
        %v2600 = vunpack.c.l.b16 %v2387
        %v2601 = vunpack.c.h.b16 %v2387
        %v2602 = vunpack.c.l.b16 %v2388
        %v2603 = vunpack.c.l.b16 %v2389
        %v2604 = vunpack.c.h.b16 %v2389
        %v2605 = vunpack.c.l.b16 %v2390
        %v2606 = vunpack.c.l.b16 %v2391
        %v2607 = vunpack.c.h.b16 %v2391
        %v2608 = vunpack.c.l.b16 %v2392
        %v2609 = vunpack.c.l.b16 %v2393
        %v2610 = vunpack.c.h.b16 %v2393
        %v2611 = vunpack.c.l.b16 %v2394
        %v2612 = vunpack.c.l.b16 %v2395
        %v2613 = vunpack.c.h.b16 %v2395
        %v2614 = vunpack.c.l.b16 %v2396
        %v2615 = vunpack.c.l.b16 %v2397
        %v2616 = vunpack.c.h.b16 %v2397
        %v2617 = vunpack.c.l.b16 %v2398
        %v2618 = vunpack.c.l.b16 %v2399
        %v2619 = vunpack.c.h.b16 %v2399
        %v2620 = vunpack.c.l.b16 %v2400
        %v2621 = vunpack.c.l.b16 %v2401
        %v2622 = vunpack.c.h.b16 %v2401
        %v2623 = vunpack.c.l.b16 %v2402
        %v2624 = vunpack.c.l.b16 %v2403
        %v2625 = vunpack.c.h.b16 %v2403
        %v2626 = vunpack.c.l.b16 %v2404
        %v2627 = vunpack.c.l.b16 %v2405
        %v2628 = vunpack.c.h.b16 %v2405
        %v2629 = vunpack.c.l.b16 %v2406
        %v2630 = vunpack.c.l.b16 %v2407
        %v2631 = vunpack.c.h.b16 %v2407
        %v2632 = vunpack.c.l.b16 %v2408
        %v2633 = vunpack.c.l.b16 %v2409
        %v2634 = vunpack.c.h.b16 %v2409
        %v2635 = vunpack.c.l.b16 %v2410
        %v2636 = vunpack.c.l.b16 %v2411
        %v2637 = vunpack.c.h.b16 %v2411
        %v2638 = vunpack.c.l.b16 %v2412
        %v2639 = vunpack.c.l.b16 %v2413
        %v2640 = vunpack.c.h.b16 %v2413
        %v2641 = vunpack.c.l.b16 %v2414
        %v2642 = vunpack.c.l.b16 %v2415
        %v2643 = vunpack.c.h.b16 %v2415
        %v2644 = vunpack.c.l.b16 %v2416
        %v2645 = vunpack.c.l.b16 %v2417
        %v2646 = vunpack.c.h.b16 %v2417
        %v2647 = vunpack.c.l.b16 %v2418
        %v2648 = vunpack.c.l.b16 %v2419
        %v2649 = vunpack.c.h.b16 %v2419
        %v2650 = vunpack.c.l.b16 %v2420
        %v2651 = vunpack.c.l.b16 %v2421
        %v2652 = vunpack.c.h.b16 %v2421
        %v2653 = vunpack.c.l.b16 %v2422
        %v2654 = vunpack.c.l.b16 %v2423
        %v2655 = vunpack.c.h.b16 %v2423
        %v2656 = vunpack.c.l.b16 %v2424
        %v2657 = vunpack.c.l.b16 %v2425
        %v2658 = vunpack.c.h.b16 %v2425
        %v2659 = vunpack.c.l.b16 %v2426
        %v2660 = vunpack.c.l.b16 %v2427
        %v2661 = vunpack.c.h.b16 %v2427
        %v2662 = vunpack.c.l.b16 %v2428
        %v2663 = vunpack.c.l.b16 %v2429
        %v2664 = vunpack.c.h.b16 %v2429
        %v2665 = vunpack.c.l.b16 %v2430
        %v2666 = vunpack.c.l.b16 %v2431
        %v2667 = vunpack.c.h.b16 %v2431
        %v2668 = vunpack.c.l.b16 %v2432
        %v2669 = vunpack.c.l.b16 %v2433
        %v2670 = vunpack.c.h.b16 %v2433
        %v2671 = vunpack.c.l.b16 %v2434
        %v2672 = vunpack.c.l.b16 %v2435
        %v2673 = vunpack.c.h.b16 %v2435
        %v2674 = vunpack.c.l.b16 %v2436
        %v2675 = vunpack.c.l.b16 %v2437
        %v2676 = vunpack.c.h.b16 %v2437
        %v2677 = vunpack.c.l.b16 %v2438
        %v2678 = vunpack.c.l.b16 %v2439
        %v2679 = vunpack.c.h.b16 %v2439
        %v2680 = vunpack.c.l.b16 %v2440
        %v2681 = vunpack.c.l.b16 %v2441
        %v2682 = vunpack.c.h.b16 %v2441
        %v2683 = vunpack.c.l.b16 %v2442
        %v2684 = vunpack.c.l.b16 %v2443
        %v2685 = vunpack.c.h.b16 %v2443
        %v2686 = vunpack.c.l.b16 %v2444
        %v2687 = vunpack.c.l.b16 %v2445
        %v2688 = vunpack.c.h.b16 %v2445
        %v2689 = vunpack.c.l.b16 %v2446
        %v2690 = vunpack.c.l.b16 %v2447
        %v2691 = vunpack.c.h.b16 %v2447
        %v2692 = vunpack.c.l.b16 %v2448
        %v2693 = vunpack.c.l.b16 %v2449
        %v2694 = vunpack.c.h.b16 %v2449
        %v2695 = vunpack.c.l.b16 %v2450
        %v2696 = vunpack.c.l.b16 %v2451
        %v2697 = vunpack.c.h.b16 %v2451
        %v2698 = vunpack.c.l.b16 %v2452
        %v2699 = vunpack.c.l.b16 %v2453
        %v2700 = vunpack.c.h.b16 %v2453
        %v2701 = vunpack.c.l.b16 %v2454
        %v2702 = vunpack.c.l.b16 %v2455
        %v2703 = vunpack.c.h.b16 %v2455
        %v2704 = vunpack.c.l.b16 %v2456
        %v2705 = vpack.c.b16 %v2564, %v2561
        %v2706 = vpack.c.b16 %v2565, %v2562
        %v2707 = vpack.c.b16 %v2566, %v2563
        %v2708 = vpack.c.b16 %v2570, %v2567
        %v2709 = vpack.c.b16 %v2571, %v2568
        %v2710 = vpack.c.b16 %v2572, %v2569
        %v2711 = vpack.c.b16 %v2576, %v2573
        %v2712 = vpack.c.b16 %v2577, %v2574
        %v2713 = vpack.c.b16 %v2578, %v2575
        %v2714 = vpack.c.b16 %v2582, %v2579
        %v2715 = vpack.c.b16 %v2583, %v2580
        %v2716 = vpack.c.b16 %v2584, %v2581
        %v2717 = vpack.c.b16 %v2588, %v2585
        %v2718 = vpack.c.b16 %v2589, %v2586
        %v2719 = vpack.c.b16 %v2590, %v2587
        %v2720 = vpack.c.b16 %v2594, %v2591
        %v2721 = vpack.c.b16 %v2595, %v2592
        %v2722 = vpack.c.b16 %v2596, %v2593
        %v2723 = vpack.c.b16 %v2600, %v2597
        %v2724 = vpack.c.b16 %v2601, %v2598
        %v2725 = vpack.c.b16 %v2602, %v2599
        %v2726 = vpack.c.b16 %v2606, %v2603
        %v2727 = vpack.c.b16 %v2607, %v2604
        %v2728 = vpack.c.b16 %v2608, %v2605
        %v2729 = vpack.c.b16 %v2612, %v2609
        %v2730 = vpack.c.b16 %v2613, %v2610
        %v2731 = vpack.c.b16 %v2614, %v2611
        %v2732 = vpack.c.b16 %v2618, %v2615
        %v2733 = vpack.c.b16 %v2619, %v2616
        %v2734 = vpack.c.b16 %v2620, %v2617
        %v2735 = vpack.c.b16 %v2624, %v2621
        %v2736 = vpack.c.b16 %v2625, %v2622
        %v2737 = vpack.c.b16 %v2626, %v2623
        %v2738 = vpack.c.b16 %v2630, %v2627
        %v2739 = vpack.c.b16 %v2631, %v2628
        %v2740 = vpack.c.b16 %v2632, %v2629
        %v2741 = vpack.c.b16 %v2636, %v2633
        %v2742 = vpack.c.b16 %v2637, %v2634
        %v2743 = vpack.c.b16 %v2638, %v2635
        %v2744 = vpack.c.b16 %v2642, %v2639
        %v2745 = vpack.c.b16 %v2643, %v2640
        %v2746 = vpack.c.b16 %v2644, %v2641
        %v2747 = vpack.c.b16 %v2648, %v2645
        %v2748 = vpack.c.b16 %v2649, %v2646
        %v2749 = vpack.c.b16 %v2650, %v2647
        %v2750 = vpack.c.b16 %v2654, %v2651
        %v2751 = vpack.c.b16 %v2655, %v2652
        %v2752 = vpack.c.b16 %v2656, %v2653
        %v2753 = vpack.c.b16 %v2660, %v2657
        %v2754 = vpack.c.b16 %v2661, %v2658
        %v2755 = vpack.c.b16 %v2662, %v2659
        %v2756 = vpack.c.b16 %v2666, %v2663
        %v2757 = vpack.c.b16 %v2667, %v2664
        %v2758 = vpack.c.b16 %v2668, %v2665
        %v2759 = vpack.c.b16 %v2672, %v2669
        %v2760 = vpack.c.b16 %v2673, %v2670
        %v2761 = vpack.c.b16 %v2674, %v2671
        %v2762 = vpack.c.b16 %v2678, %v2675
        %v2763 = vpack.c.b16 %v2679, %v2676
        %v2764 = vpack.c.b16 %v2680, %v2677
        %v2765 = vpack.c.b16 %v2684, %v2681
        %v2766 = vpack.c.b16 %v2685, %v2682
        %v2767 = vpack.c.b16 %v2686, %v2683
        %v2768 = vpack.c.b16 %v2690, %v2687
        %v2769 = vpack.c.b16 %v2691, %v2688
        %v2770 = vpack.c.b16 %v2692, %v2689
        %v2771 = vpack.c.b16 %v2696, %v2693
        %v2772 = vpack.c.b16 %v2697, %v2694
        %v2773 = vpack.c.b16 %v2698, %v2695
        %v2774 = vpack.c.b16 %v2702, %v2699
        %v2775 = vpack.c.b16 %v2703, %v2700
        %v2776 = vpack.c.b16 %v2704, %v2701
        %2849 = vmatpush.bf16.msra.mxu0 %v2726
        %2850 = vmatpush.bf16.msra.mxu0 %v2723
        %2851 = vmatpush.bf16.msra.mxu0 %v2720
        %2852 = vmatpush.bf16.msra.mxu0 %v2717
        %2853 = vmatpush.bf16.msra.mxu0 %v2714
        %2854 = vmatpush.bf16.msra.mxu0 %v2711
        %2855 = vmatpush.bf16.msra.mxu0 %v2708
        %2856 = vmatpush.bf16.msra.mxu0 %v2705
        %2857 = vmatmul.bf16.gmra.mxu0 %v2351
        %v2858 = vpop.f32.mrf.mxu0
        %v2859 = vadd.f32 %v2459, %v2858
        %v2860 = vpop.f32.mrf.mxu0
        %2861 = vdwg.mxu0
        %2862 = vmatpush.bf16.msra.mxu0 %v2750
        %2863 = vmatpush.bf16.msra.mxu0 %v2747
        %2864 = vmatpush.bf16.msra.mxu0 %v2744
        %2865 = vmatpush.bf16.msra.mxu0 %v2741
        %2866 = vmatpush.bf16.msra.mxu0 %v2738
        %2867 = vmatpush.bf16.msra.mxu0 %v2735
        %2868 = vmatpush.bf16.msra.mxu0 %v2732
        %2869 = vmatpush.bf16.msra.mxu0 %v2729
        %2870 = vmatmul.bf16.gmra.mxu0 %v2355
        %v2871 = vpop.f32.mrf.mxu0
        %v2872 = vadd.f32 %v2859, %v2871
        %v2873 = vpop.f32.mrf.mxu0
        %2874 = vdwg.mxu0
        %2875 = vmatpush.bf16.msra.mxu0 %v2774
        %2876 = vmatpush.bf16.msra.mxu0 %v2771
        %2877 = vmatpush.bf16.msra.mxu0 %v2768
        %2878 = vmatpush.bf16.msra.mxu0 %v2765
        %2879 = vmatpush.bf16.msra.mxu0 %v2762
        %2880 = vmatpush.bf16.msra.mxu0 %v2759
        %2881 = vmatpush.bf16.msra.mxu0 %v2756
        %2882 = vmatpush.bf16.msra.mxu0 %v2753
        %2883 = vmatmul.bf16.gmra.mxu0 %v2359
        %v2884 = vpop.f32.mrf.mxu0
        %v2885 = vadd.f32 %v2872, %v2884
        %v2886 = vpop.f32.mrf.mxu0
        %2887 = vdwg.mxu0
        %2888 = vmatpush.bf16.msra.mxu0 %v2727
        %2889 = vmatpush.bf16.msra.mxu0 %v2724
        %2890 = vmatpush.bf16.msra.mxu0 %v2721
        %2891 = vmatpush.bf16.msra.mxu0 %v2718
        %2892 = vmatpush.bf16.msra.mxu0 %v2715
        %2893 = vmatpush.bf16.msra.mxu0 %v2712
        %2894 = vmatpush.bf16.msra.mxu0 %v2709
        %2895 = vmatpush.bf16.msra.mxu0 %v2706
        %2896 = vmatmul.bf16.gmra.mxu0 %v2351
        %v2897 = vpop.f32.mrf.mxu0
        %v2898 = vadd.f32 %v2460, %v2897
        %v2899 = vpop.f32.mrf.mxu0
        %2900 = vdwg.mxu0
        %2901 = vmatpush.bf16.msra.mxu0 %v2751
        %2902 = vmatpush.bf16.msra.mxu0 %v2748
        %2903 = vmatpush.bf16.msra.mxu0 %v2745
        %2904 = vmatpush.bf16.msra.mxu0 %v2742
        %2905 = vmatpush.bf16.msra.mxu0 %v2739
        %2906 = vmatpush.bf16.msra.mxu0 %v2736
        %2907 = vmatpush.bf16.msra.mxu0 %v2733
        %2908 = vmatpush.bf16.msra.mxu0 %v2730
        %2909 = vmatmul.bf16.gmra.mxu0 %v2355
        %v2910 = vpop.f32.mrf.mxu0
        %v2911 = vadd.f32 %v2898, %v2910
        %v2912 = vpop.f32.mrf.mxu0
        %2913 = vdwg.mxu0
        %2914 = vmatpush.bf16.msra.mxu0 %v2775
        %2915 = vmatpush.bf16.msra.mxu0 %v2772
        %2916 = vmatpush.bf16.msra.mxu0 %v2769
        %2917 = vmatpush.bf16.msra.mxu0 %v2766
        %2918 = vmatpush.bf16.msra.mxu0 %v2763
        %2919 = vmatpush.bf16.msra.mxu0 %v2760
        %2920 = vmatpush.bf16.msra.mxu0 %v2757
        %2921 = vmatpush.bf16.msra.mxu0 %v2754
        %2922 = vmatmul.bf16.gmra.mxu0 %v2359
        %v2923 = vpop.f32.mrf.mxu0
        %v2924 = vadd.f32 %v2911, %v2923
        %v2925 = vpop.f32.mrf.mxu0
        %2926 = vdwg.mxu0
        %2927 = vmatpush.bf16.msra.mxu0 %v2728
        %2928 = vmatpush.bf16.msra.mxu0 %v2725
        %2929 = vmatpush.bf16.msra.mxu0 %v2722
        %2930 = vmatpush.bf16.msra.mxu0 %v2719
        %2931 = vmatpush.bf16.msra.mxu0 %v2716
        %2932 = vmatpush.bf16.msra.mxu0 %v2713
        %2933 = vmatpush.bf16.msra.mxu0 %v2710
        %2934 = vmatpush.bf16.msra.mxu0 %v2707
        %2935 = vmatmul.bf16.gmra.mxu0 %v2351
        %v2936 = vpop.f32.mrf.mxu0
        %v2937 = vadd.f32 %v2461, %v2936
        %v2938 = vpop.f32.mrf.mxu0
        %2939 = vdwg.mxu0
        %2940 = vmatpush.bf16.msra.mxu0 %v2752
        %2941 = vmatpush.bf16.msra.mxu0 %v2749
        %2942 = vmatpush.bf16.msra.mxu0 %v2746
        %2943 = vmatpush.bf16.msra.mxu0 %v2743
        %2944 = vmatpush.bf16.msra.mxu0 %v2740
        %2945 = vmatpush.bf16.msra.mxu0 %v2737
        %2946 = vmatpush.bf16.msra.mxu0 %v2734
        %2947 = vmatpush.bf16.msra.mxu0 %v2731
        %2948 = vmatmul.bf16.gmra.mxu0 %v2355
        %v2949 = vpop.f32.mrf.mxu0
        %v2950 = vadd.f32 %v2937, %v2949
        %v2951 = vpop.f32.mrf.mxu0
        %2952 = vdwg.mxu0
        %2953 = vmatpush.bf16.msra.mxu0 %v2776
        %2954 = vmatpush.bf16.msra.mxu0 %v2773
        %2955 = vmatpush.bf16.msra.mxu0 %v2770
        %2956 = vmatpush.bf16.msra.mxu0 %v2767
        %2957 = vmatpush.bf16.msra.mxu0 %v2764
        %2958 = vmatpush.bf16.msra.mxu0 %v2761
        %2959 = vmatpush.bf16.msra.mxu0 %v2758
        %2960 = vmatpush.bf16.msra.mxu0 %v2755
        %2961 = vmatmul.bf16.gmra.mxu0 %v2359
        %v2962 = vpop.f32.mrf.mxu0
        %v2963 = vadd.f32 %v2950, %v2962
        %v2964 = vpop.f32.mrf.mxu0
        %2965 = vdwg.mxu0
        %2966 = vst [vmem:[%s263] sm:$0xff] %v2885
        %2967 = vst [vmem:[%s263 + $0x8] sm:$0xff] %v2924
        %2968 = vst [vmem:[%s263 + $0x10] sm:$0xff] %v2963
        %s2969 = sand.u32 %s120, 1
        %s2970 = scalar_lea.sflag [#allocation4], %s2969
        %s2971 = sand.u32 %s120, 1
        %s2972 = smul.addr %s2971, 24
        %s2973 = scalar_lea.vmem [#allocation10], %s2972
        // Predicated region
        $region53: #{tpu_custom_call.1} parent=35 // pred_check
          %p2974 = pneg %p130
        $region54: #{tpu_custom_call.1} parent=35 // pred_check_branch
          %2976 = sbr.rel (%p2974) target = $region56
        $region55: #{tpu_custom_call.1} parent=35 // pred_region
          %2978 = vsyncadd %s2970, 0
          %s2979 = smul.addr %s23, 3
          %s2980 = smul.addr %s2979, 8
          %s2981 = scalar_lea.hbm %s4, %s2980
          %s2983 = sshll.u32 %s2973, 4
          %s2984 = int_to_ptr.vmem [resolvable:$true] %s2983
          %s2985 = sshll.u32 %s2981, 4
          %s2986 = int_to_ptr.hbm [resolvable:$true] %s2985
          %2988 = dma.vmem_to_hbm [thread:$0]  %s2984, 384, %s2986, %s2970
        $region56: #{tpu_custom_call.1} parent=35 // pred_fallthru
          _
      $region36: #{tpu_custom_call.1} parent=5 // pred_fallthru
        _
      %p2989 = scmp.le.s32.totalorder 2, %s18
      // Predicated region
      $region57: #{tpu_custom_call.1} parent=5 // pred_check
        %p2990 = pneg %p2989
      $region58: #{tpu_custom_call.1} parent=5 // pred_check_branch
        %2992 = sbr.rel (%p2990) target = $region60
      $region59: #{tpu_custom_call.1} parent=5 // pred_region
        %s2993 = ssub.s32 %s18, 2
        // Predicated region
        $region61: #{tpu_custom_call.1} parent=59 // pred_check
          %p2994 = pneg %p136
        $region62: #{tpu_custom_call.1} parent=59 // pred_check_branch
          %2996 = sbr.rel (%p2994) target = $region64
        $region63: #{tpu_custom_call.1} parent=59 // pred_region
          %s2997 = sand.u32 %s121, 1
          %s2998 = scalar_lea.sflag [#allocation4], %s2997
          %s2999 = sand.u32 %s121, 1
          %s3000 = smul.addr %s2999, 24
          %s3001 = scalar_lea.vmem [#allocation10], %s3000
          %3003 = dma.done %s2998, 384
        $region64: #{tpu_custom_call.1} parent=59 // pred_fallthru
          _
      $region60: #{tpu_custom_call.1} parent=5 // pred_fallthru
        _
    $region6: #{tpu_custom_call.1} parent=1 // loop_footer
      %s22 = sadd.s32 1, %s18
    $region7: #{tpu_custom_call.1} parent=1 // loop_footer_branch
      %17 = sbr.rel target = $region3
    $region8: #{tpu_custom_call.1} parent=1 // loop_exit
      _
    %3004 = vsyncpa [#allocation3], 1
    %s3005 = scalar_lea.sflag [#allocation3], 1
    %3006 = vsyncpa %s3005, 1
    %3007 = vsyncpa [#allocation6], 1
    %3008 = vsyncpa [#allocation9], 1
    %3009 = vsyncpa [#allocation4], 1
    %s3010 = scalar_lea.sflag [#allocation4], 1
    %3011 = vsyncpa %s3010, 1

</llo_original>
